<compile_context>
chip_gen: v7x
topology: tpu7x:2x2x1
jax: 0.10.0
libtpu: 0.0.40
codegen_flags: <defaults>
</compile_context>

<pallas_src>
import jax
import jax.numpy as jnp
from jax.experimental import pallas as pl
from jax.experimental.pallas import tpu as pltpu


def _round_up(x: int, m: int) -> int:
    return ((x + m - 1) // m) * m


# -----------------------------------------------------------------------------
# Pallas kernel: serial LSTM recurrence + fused FC head, single invocation.
# -----------------------------------------------------------------------------
def lstm_recurrence_kernel(gx_ref, whh_ref, wfc_ref, bfc_ref, out_ref):
    """
    gx_ref : (Np, L * 4*Hp) f32 -- precomputed x_t @ W_ih^T + (b_ih + b_hh);
                                   timestep t occupies lanes [t*4Hp, (t+1)*4Hp)
    whh_ref: (Hp, 4*Hp)     f32 -- recurrent weights, transposed & gate-padded
    wfc_ref: (Hp, Op)       f32 -- FC weights, transposed & padded
    bfc_ref: (1,  Op)       f32
    out_ref: (Np, Op)       f32 -- FC(h_last), padded; real data in [:N, :O]
    """
    Np = gx_ref.shape[0]
    Hp, G = whh_ref.shape            # G = 4 * Hp
    L = gx_ref.shape[1] // G

    # Recurrent weight loaded once; reused by every unrolled step.
    whh = whh_ref[...]

    h = jnp.zeros((Np, Hp), jnp.float32)
    c = jnp.zeros((Np, Hp), jnp.float32)

    # Fully-unrolled serial loop (L is small and static here; equivalent to
    # lax.fori_loop(..., unroll=True)).  Only h @ W_hh^T is on the serial
    # critical path -- the input projection and bias were hoisted out.
    for t in range(L):
        # t*G is a multiple of 128 -> vreg-aligned, contiguous lane slice.
        gates = gx_ref[:, t * G:(t + 1) * G] + jnp.dot(
            h, whh, preferred_element_type=jnp.float32)          # (Np, 4*Hp)

        # Hp is a multiple of 128 -> each gate is a whole-vreg lane slice.
        i_g = jax.nn.sigmoid(gates[:, 0 * Hp:1 * Hp])
        f_g = jax.nn.sigmoid(gates[:, 1 * Hp:2 * Hp])
        g_g = jnp.tanh(gates[:, 2 * Hp:3 * Hp])
        o_g = jax.nn.sigmoid(gates[:, 3 * Hp:4 * Hp])

        c = f_g * c + i_g * g_g
        h = o_g * jnp.tanh(c)

    # Fused fully-connected head on the final hidden state.
    # Op = 128 keeps the store lane-dense (single unmasked vst slab).
    out_ref[...] = (
        jnp.dot(h, wfc_ref[...], preferred_element_type=jnp.float32)
        + bfc_ref[...]
    ).astype(out_ref.dtype)


# -----------------------------------------------------------------------------
# Wrapper: embedding gather + hoisted input projection (JAX glue) + kernel.
# -----------------------------------------------------------------------------
def lstm_forward(x_ids, params):
    """Forward pass matching the PyTorch module (Embedding -> LSTM -> Linear).

    x_ids: int32 [N, L] token ids (batch-first).  Returns float32 [N]
    (the `.squeeze()` of the [N, 1] FC output, like the PyTorch module).
    """
    emb  = params["embedding"]   # [V, E]
    w_ih = params["w_ih"]        # [4H, E]  (nn.LSTM weight_ih_l0)
    w_hh = params["w_hh"]        # [4H, H]  (nn.LSTM weight_hh_l0)
    b_ih = params["b_ih"]        # [4H]
    b_hh = params["b_hh"]        # [4H]
    w_fc = params["w_fc"]        # [O, H]   (nn.Linear weight)
    b_fc = params["b_fc"]        # [O]

    N, L = x_ids.shape
    E = emb.shape[1]
    H = w_hh.shape[1]
    O = w_fc.shape[0]
    f32 = jnp.float32

    # Hardware-friendly padded sizes (exactness preserved; see kernel header).
    Hp = _round_up(max(H, 128), 128)   # gate slices -> whole-vreg lane slices
    Op = _round_up(max(O, 128), 128)   # lane-dense FC output
    Np = _round_up(max(N, 8), 8)       # sublane-full batch tiles
    G = 4 * Hp

    # --- one-time weight prep: transpose + gate-block zero padding ----------
    def pad_gates_t(w):                 # [4H, D] -> [D, 4*Hp] (transposed)
        d = w.shape[1]
        out = jnp.zeros((d, G), f32)
        for k in range(4):              # PyTorch gate order i, f, g, o
            out = out.at[:, k * Hp:k * Hp + H].set(w[k * H:(k + 1) * H, :].T)
        return out

    def pad_gates_vec(b):               # [4H] -> [1, 4*Hp]
        out = jnp.zeros((1, G), f32)
        for k in range(4):
            out = out.at[0, k * Hp:k * Hp + H].set(b[k * H:(k + 1) * H])
        return out

    wih_p = pad_gates_t(w_ih)                                          # [E, G]
    whh_p = jnp.zeros((Hp, G), f32).at[:H, :].set(pad_gates_t(w_hh))   # [Hp, G]
    b_p   = pad_gates_vec(b_ih + b_hh)                                 # [1, G]
    wfc_p = jnp.zeros((Hp, Op), f32).at[:H, :O].set(w_fc.T)            # [Hp, Op]
    bfc_p = jnp.zeros((1, Op), f32).at[0, :O].set(b_fc)                # [1, Op]

    # --- JAX glue: embedding gather + hoisted input projection --------------
    # Batch-major throughout: no HBM transpose of the activations.
    x_emb = jnp.take(emb, x_ids, axis=0).astype(f32)             # [N, L, E]
    x_emb = jnp.pad(x_emb, ((0, Np - N), (0, 0), (0, 0)))        # [Np, L, E]
    # Input projection for ALL timesteps as one batched matmul (off the serial
    # critical path); the combined bias is folded in here once.
    gx = x_emb.reshape(Np * L, E) @ wih_p + b_p                  # [Np*L, G]
    gx = gx.reshape(Np, L * G)       # row-major: free reshape, lane-aligned

    out = pl.pallas_call(
        lstm_recurrence_kernel,
        out_shape=jax.ShapeDtypeStruct((Np, Op), f32),
        # Single invocation, whole arrays resident in VMEM (a few hundred KiB
        # here) -> zero per-step grid/pipeline overhead.  For large N, split
        # the batch over a leading "parallel" grid axis instead (v7x: 2 TCs).
        in_specs=[
            pl.BlockSpec(memory_space=pltpu.MemorySpace.VMEM),   # gx
            pl.BlockSpec(memory_space=pltpu.MemorySpace.VMEM),   # W_hh^T
            pl.BlockSpec(memory_space=pltpu.MemorySpace.VMEM),   # W_fc^T
            pl.BlockSpec(memory_space=pltpu.MemorySpace.VMEM),   # b_fc
        ],
        out_specs=pl.BlockSpec(memory_space=pltpu.MemorySpace.VMEM),
    )(gx, whh_p, wfc_p, bfc_p)

    # Un-pad and reproduce PyTorch's `.squeeze()` on the [N, O] result.
    return jnp.squeeze(out[:N, :O])


# -----------------------------------------------------------------------------
# Pure-JAX reference (PyTorch nn.LSTM / nn.Linear semantics) for validation.
# -----------------------------------------------------------------------------
def lstm_reference(x_ids, params):
    emb, w_ih, w_hh = params["embedding"], params["w_ih"], params["w_hh"]
    b = params["b_ih"] + params["b_hh"]
    w_fc, b_fc = params["w_fc"], params["b_fc"]
    H = w_hh.shape[1]

    x = jnp.take(emb, x_ids, axis=0)                  # [N, L, E]
    n, l, _ = x.shape
    h = jnp.zeros((n, H), jnp.float32)
    c = jnp.zeros((n, H), jnp.float32)
    for t in range(l):
        g = x[:, t, :] @ w_ih.T + h @ w_hh.T + b
        i = jax.nn.sigmoid(g[:, 0 * H:1 * H])
        f = jax.nn.sigmoid(g[:, 1 * H:2 * H])
        gg = jnp.tanh(g[:, 2 * H:3 * H])
        o = jax.nn.sigmoid(g[:, 3 * H:4 * H])
        c = f * c + i * gg
        h = o * jnp.tanh(c)
    return jnp.squeeze(h @ w_fc.T + b_fc)


def init_params(key, input_dim, embedding_dim, hidden_dim, output_dim=1):
    """Deterministic synthetic parameters with PyTorch-equivalent shapes."""
    ks = jax.random.split(key, 7)
    H = hidden_dim
    bound = 1.0 / float(H) ** 0.5

    def u(k, shape):
        return jax.random.uniform(k, shape, jnp.float32, -bound, bound)

    return {
        "embedding": jax.random.normal(ks[0], (input_dim, embedding_dim),
                                       jnp.float32),
        "w_ih": u(ks[1], (4 * H, embedding_dim)),
        "w_hh": u(ks[2], (4 * H, H)),
        "b_ih": u(ks[3], (4 * H,)),
        "b_hh": u(ks[4], (4 * H,)),
        "w_fc": u(ks[5], (output_dim, H)),
        "b_fc": u(ks[6], (output_dim,)),
    }


if __name__ == "__main__":
    # Small, module-consistent shapes: vocab=10 digits, batch=2, seq=8,
    # embedding_dim=16, hidden_dim=32, output_dim=1.
    INPUT_DIM, EMB_DIM, HID_DIM, OUT_DIM = 10, 16, 32, 1
    N, L = 2, 8

    key = jax.random.PRNGKey(0)
    pkey, xkey = jax.random.split(key)
    params = init_params(pkey, INPUT_DIM, EMB_DIM, HID_DIM, OUT_DIM)
    x_ids = jax.random.randint(xkey, (N, L), 0, INPUT_DIM, dtype=jnp.int32)

    y = lstm_forward(x_ids, params)
    jax.block_until_ready(y)
    assert y.shape == (N,), y.shape

    y_ref = lstm_reference(x_ids, params)
    assert jnp.allclose(y, y_ref, atol=1e-3, rtol=1e-3), (y, y_ref)

    print("KERNEL_OK")
</pallas_src>

<mosaic_0001>
module attributes {stable_mosaic.version = 11 : i64} {
  func.func @lstm_recurrence_kernel(%arg0: memref<8x4096xf32, #tpu.memory_space<vmem>>, %arg1: memref<128x512xf32, #tpu.memory_space<vmem>>, %arg2: memref<128x128xf32, #tpu.memory_space<vmem>>, %arg3: memref<1x128xf32, #tpu.memory_space<vmem>>, %arg4: memref<8x128xf32, #tpu.memory_space<vmem>>) attributes {dimension_semantics = [], scalar_prefetch = 0 : i64, scratch_operands = 0 : i64, tpu.core_type = #tpu.core_type<tc>} {
    %c0 = arith.constant 0 : index
    %c0_0 = arith.constant 0 : index
    %0 = vector.load %arg1[%c0, %c0_0] : memref<128x512xf32, #tpu.memory_space<vmem>>, vector<128x512xf32>
    %cst = arith.constant 0.000000e+00 : f32
    %1 = vector.broadcast %cst : f32 to vector<8x128xf32>
    %cst_1 = arith.constant 0.000000e+00 : f32
    %2 = vector.broadcast %cst_1 : f32 to vector<8x128xf32>
    %c0_2 = arith.constant 0 : index
    %c0_3 = arith.constant 0 : index
    %3 = vector.load %arg0[%c0_2, %c0_3] : memref<8x4096xf32, #tpu.memory_space<vmem>>, vector<8x512xf32>
    %cst_4 = arith.constant dense<0.000000e+00> : vector<8x512xf32>
    %4 = tpu.matmul %1, %0, %cst_4 {dimension_numbers = #tpu.dot_dimension_numbers<[1], [0], [0], [1], [0, 0, 1, 1], [], []>} : vector<8x128xf32>, vector<128x512xf32>, vector<8x512xf32> -> vector<8x512xf32>
    %5 = arith.addf %3, %4 : vector<8x512xf32>
    %6 = vector.extract_strided_slice %5 {offsets = [0, 0], sizes = [8, 128], strides = [1, 1]} : vector<8x512xf32> to vector<8x128xf32>
    %7 = arith.negf %6 : vector<8x128xf32>
    %8 = math.exp %7 : vector<8x128xf32>
    %cst_5 = arith.constant 1.000000e+00 : f32
    %9 = vector.broadcast %cst_5 : f32 to vector<8x128xf32>
    %10 = arith.addf %9, %8 : vector<8x128xf32>
    %11 = arith.divf %9, %10 : vector<8x128xf32>
    %12 = vector.extract_strided_slice %5 {offsets = [0, 128], sizes = [8, 128], strides = [1, 1]} : vector<8x512xf32> to vector<8x128xf32>
    %13 = arith.negf %12 : vector<8x128xf32>
    %14 = math.exp %13 : vector<8x128xf32>
    %cst_6 = arith.constant 1.000000e+00 : f32
    %15 = vector.broadcast %cst_6 : f32 to vector<8x128xf32>
    %16 = arith.addf %15, %14 : vector<8x128xf32>
    %17 = arith.divf %15, %16 : vector<8x128xf32>
    %18 = vector.extract_strided_slice %5 {offsets = [0, 256], sizes = [8, 128], strides = [1, 1]} : vector<8x512xf32> to vector<8x128xf32>
    %19 = math.tanh %18 : vector<8x128xf32>
    %20 = vector.extract_strided_slice %5 {offsets = [0, 384], sizes = [8, 128], strides = [1, 1]} : vector<8x512xf32> to vector<8x128xf32>
    %21 = arith.negf %20 : vector<8x128xf32>
    %22 = math.exp %21 : vector<8x128xf32>
    %cst_7 = arith.constant 1.000000e+00 : f32
    %23 = vector.broadcast %cst_7 : f32 to vector<8x128xf32>
    %24 = arith.addf %23, %22 : vector<8x128xf32>
    %25 = arith.divf %23, %24 : vector<8x128xf32>
    %26 = arith.mulf %17, %2 : vector<8x128xf32>
    %27 = arith.mulf %11, %19 : vector<8x128xf32>
    %28 = arith.addf %26, %27 : vector<8x128xf32>
    %29 = math.tanh %28 : vector<8x128xf32>
    %30 = arith.mulf %25, %29 : vector<8x128xf32>
    %c0_8 = arith.constant 0 : index
    %c512 = arith.constant 512 : index
    %31 = vector.load %arg0[%c0_8, %c512] : memref<8x4096xf32, #tpu.memory_space<vmem>>, vector<8x512xf32>
    %cst_9 = arith.constant dense<0.000000e+00> : vector<8x512xf32>
    %32 = tpu.matmul %30, %0, %cst_9 {dimension_numbers = #tpu.dot_dimension_numbers<[1], [0], [0], [1], [0, 0, 1, 1], [], []>} : vector<8x128xf32>, vector<128x512xf32>, vector<8x512xf32> -> vector<8x512xf32>
    %33 = arith.addf %31, %32 : vector<8x512xf32>
    %34 = vector.extract_strided_slice %33 {offsets = [0, 0], sizes = [8, 128], strides = [1, 1]} : vector<8x512xf32> to vector<8x128xf32>
    %35 = arith.negf %34 : vector<8x128xf32>
    %36 = math.exp %35 : vector<8x128xf32>
    %cst_10 = arith.constant 1.000000e+00 : f32
    %37 = vector.broadcast %cst_10 : f32 to vector<8x128xf32>
    %38 = arith.addf %37, %36 : vector<8x128xf32>
    %39 = arith.divf %37, %38 : vector<8x128xf32>
    %40 = vector.extract_strided_slice %33 {offsets = [0, 128], sizes = [8, 128], strides = [1, 1]} : vector<8x512xf32> to vector<8x128xf32>
    %41 = arith.negf %40 : vector<8x128xf32>
    %42 = math.exp %41 : vector<8x128xf32>
    %cst_11 = arith.constant 1.000000e+00 : f32
    %43 = vector.broadcast %cst_11 : f32 to vector<8x128xf32>
    %44 = arith.addf %43, %42 : vector<8x128xf32>
    %45 = arith.divf %43, %44 : vector<8x128xf32>
    %46 = vector.extract_strided_slice %33 {offsets = [0, 256], sizes = [8, 128], strides = [1, 1]} : vector<8x512xf32> to vector<8x128xf32>
    %47 = math.tanh %46 : vector<8x128xf32>
    %48 = vector.extract_strided_slice %33 {offsets = [0, 384], sizes = [8, 128], strides = [1, 1]} : vector<8x512xf32> to vector<8x128xf32>
    %49 = arith.negf %48 : vector<8x128xf32>
    %50 = math.exp %49 : vector<8x128xf32>
    %cst_12 = arith.constant 1.000000e+00 : f32
    %51 = vector.broadcast %cst_12 : f32 to vector<8x128xf32>
    %52 = arith.addf %51, %50 : vector<8x128xf32>
    %53 = arith.divf %51, %52 : vector<8x128xf32>
    %54 = arith.mulf %45, %28 : vector<8x128xf32>
    %55 = arith.mulf %39, %47 : vector<8x128xf32>
    %56 = arith.addf %54, %55 : vector<8x128xf32>
    %57 = math.tanh %56 : vector<8x128xf32>
    %58 = arith.mulf %53, %57 : vector<8x128xf32>
    %c0_13 = arith.constant 0 : index
    %c1024 = arith.constant 1024 : index
    %59 = vector.load %arg0[%c0_13, %c1024] : memref<8x4096xf32, #tpu.memory_space<vmem>>, vector<8x512xf32>
    %cst_14 = arith.constant dense<0.000000e+00> : vector<8x512xf32>
    %60 = tpu.matmul %58, %0, %cst_14 {dimension_numbers = #tpu.dot_dimension_numbers<[1], [0], [0], [1], [0, 0, 1, 1], [], []>} : vector<8x128xf32>, vector<128x512xf32>, vector<8x512xf32> -> vector<8x512xf32>
    %61 = arith.addf %59, %60 : vector<8x512xf32>
    %62 = vector.extract_strided_slice %61 {offsets = [0, 0], sizes = [8, 128], strides = [1, 1]} : vector<8x512xf32> to vector<8x128xf32>
    %63 = arith.negf %62 : vector<8x128xf32>
    %64 = math.exp %63 : vector<8x128xf32>
    %cst_15 = arith.constant 1.000000e+00 : f32
    %65 = vector.broadcast %cst_15 : f32 to vector<8x128xf32>
    %66 = arith.addf %65, %64 : vector<8x128xf32>
    %67 = arith.divf %65, %66 : vector<8x128xf32>
    %68 = vector.extract_strided_slice %61 {offsets = [0, 128], sizes = [8, 128], strides = [1, 1]} : vector<8x512xf32> to vector<8x128xf32>
    %69 = arith.negf %68 : vector<8x128xf32>
    %70 = math.exp %69 : vector<8x128xf32>
    %cst_16 = arith.constant 1.000000e+00 : f32
    %71 = vector.broadcast %cst_16 : f32 to vector<8x128xf32>
    %72 = arith.addf %71, %70 : vector<8x128xf32>
    %73 = arith.divf %71, %72 : vector<8x128xf32>
    %74 = vector.extract_strided_slice %61 {offsets = [0, 256], sizes = [8, 128], strides = [1, 1]} : vector<8x512xf32> to vector<8x128xf32>
    %75 = math.tanh %74 : vector<8x128xf32>
    %76 = vector.extract_strided_slice %61 {offsets = [0, 384], sizes = [8, 128], strides = [1, 1]} : vector<8x512xf32> to vector<8x128xf32>
    %77 = arith.negf %76 : vector<8x128xf32>
    %78 = math.exp %77 : vector<8x128xf32>
    %cst_17 = arith.constant 1.000000e+00 : f32
    %79 = vector.broadcast %cst_17 : f32 to vector<8x128xf32>
    %80 = arith.addf %79, %78 : vector<8x128xf32>
    %81 = arith.divf %79, %80 : vector<8x128xf32>
    %82 = arith.mulf %73, %56 : vector<8x128xf32>
    %83 = arith.mulf %67, %75 : vector<8x128xf32>
    %84 = arith.addf %82, %83 : vector<8x128xf32>
    %85 = math.tanh %84 : vector<8x128xf32>
    %86 = arith.mulf %81, %85 : vector<8x128xf32>
    %c0_18 = arith.constant 0 : index
    %c1536 = arith.constant 1536 : index
    %87 = vector.load %arg0[%c0_18, %c1536] : memref<8x4096xf32, #tpu.memory_space<vmem>>, vector<8x512xf32>
    %cst_19 = arith.constant dense<0.000000e+00> : vector<8x512xf32>
    %88 = tpu.matmul %86, %0, %cst_19 {dimension_numbers = #tpu.dot_dimension_numbers<[1], [0], [0], [1], [0, 0, 1, 1], [], []>} : vector<8x128xf32>, vector<128x512xf32>, vector<8x512xf32> -> vector<8x512xf32>
    %89 = arith.addf %87, %88 : vector<8x512xf32>
    %90 = vector.extract_strided_slice %89 {offsets = [0, 0], sizes = [8, 128], strides = [1, 1]} : vector<8x512xf32> to vector<8x128xf32>
    %91 = arith.negf %90 : vector<8x128xf32>
    %92 = math.exp %91 : vector<8x128xf32>
    %cst_20 = arith.constant 1.000000e+00 : f32
    %93 = vector.broadcast %cst_20 : f32 to vector<8x128xf32>
    %94 = arith.addf %93, %92 : vector<8x128xf32>
    %95 = arith.divf %93, %94 : vector<8x128xf32>
    %96 = vector.extract_strided_slice %89 {offsets = [0, 128], sizes = [8, 128], strides = [1, 1]} : vector<8x512xf32> to vector<8x128xf32>
    %97 = arith.negf %96 : vector<8x128xf32>
    %98 = math.exp %97 : vector<8x128xf32>
    %cst_21 = arith.constant 1.000000e+00 : f32
    %99 = vector.broadcast %cst_21 : f32 to vector<8x128xf32>
    %100 = arith.addf %99, %98 : vector<8x128xf32>
    %101 = arith.divf %99, %100 : vector<8x128xf32>
    %102 = vector.extract_strided_slice %89 {offsets = [0, 256], sizes = [8, 128], strides = [1, 1]} : vector<8x512xf32> to vector<8x128xf32>
    %103 = math.tanh %102 : vector<8x128xf32>
    %104 = vector.extract_strided_slice %89 {offsets = [0, 384], sizes = [8, 128], strides = [1, 1]} : vector<8x512xf32> to vector<8x128xf32>
    %105 = arith.negf %104 : vector<8x128xf32>
    %106 = math.exp %105 : vector<8x128xf32>
    %cst_22 = arith.constant 1.000000e+00 : f32
    %107 = vector.broadcast %cst_22 : f32 to vector<8x128xf32>
    %108 = arith.addf %107, %106 : vector<8x128xf32>
    %109 = arith.divf %107, %108 : vector<8x128xf32>
    %110 = arith.mulf %101, %84 : vector<8x128xf32>
    %111 = arith.mulf %95, %103 : vector<8x128xf32>
    %112 = arith.addf %110, %111 : vector<8x128xf32>
    %113 = math.tanh %112 : vector<8x128xf32>
    %114 = arith.mulf %109, %113 : vector<8x128xf32>
    %c0_23 = arith.constant 0 : index
    %c2048 = arith.constant 2048 : index
    %115 = vector.load %arg0[%c0_23, %c2048] : memref<8x4096xf32, #tpu.memory_space<vmem>>, vector<8x512xf32>
    %cst_24 = arith.constant dense<0.000000e+00> : vector<8x512xf32>
    %116 = tpu.matmul %114, %0, %cst_24 {dimension_numbers = #tpu.dot_dimension_numbers<[1], [0], [0], [1], [0, 0, 1, 1], [], []>} : vector<8x128xf32>, vector<128x512xf32>, vector<8x512xf32> -> vector<8x512xf32>
    %117 = arith.addf %115, %116 : vector<8x512xf32>
    %118 = vector.extract_strided_slice %117 {offsets = [0, 0], sizes = [8, 128], strides = [1, 1]} : vector<8x512xf32> to vector<8x128xf32>
    %119 = arith.negf %118 : vector<8x128xf32>
    %120 = math.exp %119 : vector<8x128xf32>
    %cst_25 = arith.constant 1.000000e+00 : f32
    %121 = vector.broadcast %cst_25 : f32 to vector<8x128xf32>
    %122 = arith.addf %121, %120 : vector<8x128xf32>
    %123 = arith.divf %121, %122 : vector<8x128xf32>
    %124 = vector.extract_strided_slice %117 {offsets = [0, 128], sizes = [8, 128], strides = [1, 1]} : vector<8x512xf32> to vector<8x128xf32>
    %125 = arith.negf %124 : vector<8x128xf32>
    %126 = math.exp %125 : vector<8x128xf32>
    %cst_26 = arith.constant 1.000000e+00 : f32
    %127 = vector.broadcast %cst_26 : f32 to vector<8x128xf32>
    %128 = arith.addf %127, %126 : vector<8x128xf32>
    %129 = arith.divf %127, %128 : vector<8x128xf32>
    %130 = vector.extract_strided_slice %117 {offsets = [0, 256], sizes = [8, 128], strides = [1, 1]} : vector<8x512xf32> to vector<8x128xf32>
    %131 = math.tanh %130 : vector<8x128xf32>
    %132 = vector.extract_strided_slice %117 {offsets = [0, 384], sizes = [8, 128], strides = [1, 1]} : vector<8x512xf32> to vector<8x128xf32>
    %133 = arith.negf %132 : vector<8x128xf32>
    %134 = math.exp %133 : vector<8x128xf32>
    %cst_27 = arith.constant 1.000000e+00 : f32
    %135 = vector.broadcast %cst_27 : f32 to vector<8x128xf32>
    %136 = arith.addf %135, %134 : vector<8x128xf32>
    %137 = arith.divf %135, %136 : vector<8x128xf32>
    %138 = arith.mulf %129, %112 : vector<8x128xf32>
    %139 = arith.mulf %123, %131 : vector<8x128xf32>
    %140 = arith.addf %138, %139 : vector<8x128xf32>
    %141 = math.tanh %140 : vector<8x128xf32>
    %142 = arith.mulf %137, %141 : vector<8x128xf32>
    %c0_28 = arith.constant 0 : index
    %c2560 = arith.constant 2560 : index
    %143 = vector.load %arg0[%c0_28, %c2560] : memref<8x4096xf32, #tpu.memory_space<vmem>>, vector<8x512xf32>
    %cst_29 = arith.constant dense<0.000000e+00> : vector<8x512xf32>
    %144 = tpu.matmul %142, %0, %cst_29 {dimension_numbers = #tpu.dot_dimension_numbers<[1], [0], [0], [1], [0, 0, 1, 1], [], []>} : vector<8x128xf32>, vector<128x512xf32>, vector<8x512xf32> -> vector<8x512xf32>
    %145 = arith.addf %143, %144 : vector<8x512xf32>
    %146 = vector.extract_strided_slice %145 {offsets = [0, 0], sizes = [8, 128], strides = [1, 1]} : vector<8x512xf32> to vector<8x128xf32>
    %147 = arith.negf %146 : vector<8x128xf32>
    %148 = math.exp %147 : vector<8x128xf32>
    %cst_30 = arith.constant 1.000000e+00 : f32
    %149 = vector.broadcast %cst_30 : f32 to vector<8x128xf32>
    %150 = arith.addf %149, %148 : vector<8x128xf32>
    %151 = arith.divf %149, %150 : vector<8x128xf32>
    %152 = vector.extract_strided_slice %145 {offsets = [0, 128], sizes = [8, 128], strides = [1, 1]} : vector<8x512xf32> to vector<8x128xf32>
    %153 = arith.negf %152 : vector<8x128xf32>
    %154 = math.exp %153 : vector<8x128xf32>
    %cst_31 = arith.constant 1.000000e+00 : f32
    %155 = vector.broadcast %cst_31 : f32 to vector<8x128xf32>
    %156 = arith.addf %155, %154 : vector<8x128xf32>
    %157 = arith.divf %155, %156 : vector<8x128xf32>
    %158 = vector.extract_strided_slice %145 {offsets = [0, 256], sizes = [8, 128], strides = [1, 1]} : vector<8x512xf32> to vector<8x128xf32>
    %159 = math.tanh %158 : vector<8x128xf32>
    %160 = vector.extract_strided_slice %145 {offsets = [0, 384], sizes = [8, 128], strides = [1, 1]} : vector<8x512xf32> to vector<8x128xf32>
    %161 = arith.negf %160 : vector<8x128xf32>
    %162 = math.exp %161 : vector<8x128xf32>
    %cst_32 = arith.constant 1.000000e+00 : f32
    %163 = vector.broadcast %cst_32 : f32 to vector<8x128xf32>
    %164 = arith.addf %163, %162 : vector<8x128xf32>
    %165 = arith.divf %163, %164 : vector<8x128xf32>
    %166 = arith.mulf %157, %140 : vector<8x128xf32>
    %167 = arith.mulf %151, %159 : vector<8x128xf32>
    %168 = arith.addf %166, %167 : vector<8x128xf32>
    %169 = math.tanh %168 : vector<8x128xf32>
    %170 = arith.mulf %165, %169 : vector<8x128xf32>
    %c0_33 = arith.constant 0 : index
    %c3072 = arith.constant 3072 : index
    %171 = vector.load %arg0[%c0_33, %c3072] : memref<8x4096xf32, #tpu.memory_space<vmem>>, vector<8x512xf32>
    %cst_34 = arith.constant dense<0.000000e+00> : vector<8x512xf32>
    %172 = tpu.matmul %170, %0, %cst_34 {dimension_numbers = #tpu.dot_dimension_numbers<[1], [0], [0], [1], [0, 0, 1, 1], [], []>} : vector<8x128xf32>, vector<128x512xf32>, vector<8x512xf32> -> vector<8x512xf32>
    %173 = arith.addf %171, %172 : vector<8x512xf32>
    %174 = vector.extract_strided_slice %173 {offsets = [0, 0], sizes = [8, 128], strides = [1, 1]} : vector<8x512xf32> to vector<8x128xf32>
    %175 = arith.negf %174 : vector<8x128xf32>
    %176 = math.exp %175 : vector<8x128xf32>
    %cst_35 = arith.constant 1.000000e+00 : f32
    %177 = vector.broadcast %cst_35 : f32 to vector<8x128xf32>
    %178 = arith.addf %177, %176 : vector<8x128xf32>
    %179 = arith.divf %177, %178 : vector<8x128xf32>
    %180 = vector.extract_strided_slice %173 {offsets = [0, 128], sizes = [8, 128], strides = [1, 1]} : vector<8x512xf32> to vector<8x128xf32>
    %181 = arith.negf %180 : vector<8x128xf32>
    %182 = math.exp %181 : vector<8x128xf32>
    %cst_36 = arith.constant 1.000000e+00 : f32
    %183 = vector.broadcast %cst_36 : f32 to vector<8x128xf32>
    %184 = arith.addf %183, %182 : vector<8x128xf32>
    %185 = arith.divf %183, %184 : vector<8x128xf32>
    %186 = vector.extract_strided_slice %173 {offsets = [0, 256], sizes = [8, 128], strides = [1, 1]} : vector<8x512xf32> to vector<8x128xf32>
    %187 = math.tanh %186 : vector<8x128xf32>
    %188 = vector.extract_strided_slice %173 {offsets = [0, 384], sizes = [8, 128], strides = [1, 1]} : vector<8x512xf32> to vector<8x128xf32>
    %189 = arith.negf %188 : vector<8x128xf32>
    %190 = math.exp %189 : vector<8x128xf32>
    %cst_37 = arith.constant 1.000000e+00 : f32
    %191 = vector.broadcast %cst_37 : f32 to vector<8x128xf32>
    %192 = arith.addf %191, %190 : vector<8x128xf32>
    %193 = arith.divf %191, %192 : vector<8x128xf32>
    %194 = arith.mulf %185, %168 : vector<8x128xf32>
    %195 = arith.mulf %179, %187 : vector<8x128xf32>
    %196 = arith.addf %194, %195 : vector<8x128xf32>
    %197 = math.tanh %196 : vector<8x128xf32>
    %198 = arith.mulf %193, %197 : vector<8x128xf32>
    %c0_38 = arith.constant 0 : index
    %c3584 = arith.constant 3584 : index
    %199 = vector.load %arg0[%c0_38, %c3584] : memref<8x4096xf32, #tpu.memory_space<vmem>>, vector<8x512xf32>
    %cst_39 = arith.constant dense<0.000000e+00> : vector<8x512xf32>
    %200 = tpu.matmul %198, %0, %cst_39 {dimension_numbers = #tpu.dot_dimension_numbers<[1], [0], [0], [1], [0, 0, 1, 1], [], []>} : vector<8x128xf32>, vector<128x512xf32>, vector<8x512xf32> -> vector<8x512xf32>
    %201 = arith.addf %199, %200 : vector<8x512xf32>
    %202 = vector.extract_strided_slice %201 {offsets = [0, 0], sizes = [8, 128], strides = [1, 1]} : vector<8x512xf32> to vector<8x128xf32>
    %203 = arith.negf %202 : vector<8x128xf32>
    %204 = math.exp %203 : vector<8x128xf32>
    %cst_40 = arith.constant 1.000000e+00 : f32
    %205 = vector.broadcast %cst_40 : f32 to vector<8x128xf32>
    %206 = arith.addf %205, %204 : vector<8x128xf32>
    %207 = arith.divf %205, %206 : vector<8x128xf32>
    %208 = vector.extract_strided_slice %201 {offsets = [0, 128], sizes = [8, 128], strides = [1, 1]} : vector<8x512xf32> to vector<8x128xf32>
    %209 = arith.negf %208 : vector<8x128xf32>
    %210 = math.exp %209 : vector<8x128xf32>
    %cst_41 = arith.constant 1.000000e+00 : f32
    %211 = vector.broadcast %cst_41 : f32 to vector<8x128xf32>
    %212 = arith.addf %211, %210 : vector<8x128xf32>
    %213 = arith.divf %211, %212 : vector<8x128xf32>
    %214 = vector.extract_strided_slice %201 {offsets = [0, 256], sizes = [8, 128], strides = [1, 1]} : vector<8x512xf32> to vector<8x128xf32>
    %215 = math.tanh %214 : vector<8x128xf32>
    %216 = vector.extract_strided_slice %201 {offsets = [0, 384], sizes = [8, 128], strides = [1, 1]} : vector<8x512xf32> to vector<8x128xf32>
    %217 = arith.negf %216 : vector<8x128xf32>
    %218 = math.exp %217 : vector<8x128xf32>
    %cst_42 = arith.constant 1.000000e+00 : f32
    %219 = vector.broadcast %cst_42 : f32 to vector<8x128xf32>
    %220 = arith.addf %219, %218 : vector<8x128xf32>
    %221 = arith.divf %219, %220 : vector<8x128xf32>
    %222 = arith.mulf %213, %196 : vector<8x128xf32>
    %223 = arith.mulf %207, %215 : vector<8x128xf32>
    %224 = arith.addf %222, %223 : vector<8x128xf32>
    %225 = math.tanh %224 : vector<8x128xf32>
    %226 = arith.mulf %221, %225 : vector<8x128xf32>
    %c0_43 = arith.constant 0 : index
    %c0_44 = arith.constant 0 : index
    %227 = vector.load %arg2[%c0_43, %c0_44] : memref<128x128xf32, #tpu.memory_space<vmem>>, vector<128x128xf32>
    %cst_45 = arith.constant dense<0.000000e+00> : vector<8x128xf32>
    %228 = tpu.matmul %226, %227, %cst_45 {dimension_numbers = #tpu.dot_dimension_numbers<[1], [0], [0], [1], [0, 0, 1, 1], [], []>} : vector<8x128xf32>, vector<128x128xf32>, vector<8x128xf32> -> vector<8x128xf32>
    %c0_46 = arith.constant 0 : index
    %c0_47 = arith.constant 0 : index
    %229 = vector.load %arg3[%c0_46, %c0_47] : memref<1x128xf32, #tpu.memory_space<vmem>>, vector<1x128xf32>
    %230 = vector.broadcast %229 : vector<1x128xf32> to vector<8x128xf32>
    %231 = arith.addf %228, %230 : vector<8x128xf32>
    %c0_48 = arith.constant 0 : index
    %c0_49 = arith.constant 0 : index
    %232 = vector.load %arg4[%c0_48, %c0_49] : memref<8x128xf32, #tpu.memory_space<vmem>>, vector<8x128xf32>
    tpu.vector_store %arg4[%c0_48, %c0_49], %231 {strides = array<i32>} : memref<8x128xf32, #tpu.memory_space<vmem>>, vector<8x128xf32>,
    return
  }
}

</mosaic_0001>

<llo_original>
// kernel: tpu_custom_call.1
$region0: #{tpu_custom_call.1}
  #allocation0 [shape = 'u32[]', space=smem, size = 0x4, offset = 0x4, fixed_abs, tag = 'smem constant byte address 0x4 - core index']
  #allocation1 [shape = 'u32[144,128]{1,0:T(1,128)}', space=vmem, size = 0x12000, scoped, tag = 'internal scratch']
  %s0 = inlined_call_operand.hbm [shape: f32[8,4096], index: 0, kind: input, shape index: {}]
  %s1 = inlined_call_operand.hbm [shape: f32[128,512], index: 1, kind: input, shape index: {}]
  %s2 = inlined_call_operand.hbm [shape: f32[128,128], index: 2, kind: input, shape index: {}]
  %s3 = inlined_call_operand.vmem [shape: f32[1,128], index: 3, kind: input, shape index: {}]
  %s4 = inlined_call_operand.hbm [shape: f32[8,128], index: 4, kind: output, shape index: {}]
  %s5 = sld [smem:[#allocation0]]
  $region38: #{tpu_custom_call.1} parent=0
    _
  %s7 = ssub.s32 1, %s5
  %s8 = scalar_select 0, %s7, %s5
  $region1: #{tpu_custom_call.1} parent=0
    #allocation2 [shape = 'u8[131072]{0}', space=vmem, size = 0x20000, scoped, tag = 'input window, operand 0, single buffered']
    #allocation3 [shape = 's32[1]{0}', space=sflag, size = 0x4, scoped, tag = 'scoped memory for tpu_custom_call.1']
    #allocation4 [shape = 's32[1]{0}', space=sflag, size = 0x4, scoped, tag = 'scoped memory for tpu_custom_call.1']
    #allocation5 [shape = 'u8[262144]{0}', space=vmem, size = 0x40000, scoped, tag = 'input window, operand 1, single buffered']
    #allocation6 [shape = 's32[1]{0}', space=sflag, size = 0x4, scoped, tag = 'scoped memory for tpu_custom_call.1']
    #allocation7 [shape = 'u8[65536]{0}', space=vmem, size = 0x10000, scoped, tag = 'input window, operand 2, single buffered']
    #allocation8 [shape = 'u8[4096]{0}', space=vmem, size = 0x1000, scoped, tag = 'output window, operand 0, single buffered']
    %9 = vsyncpa [#allocation3], 0
    %10 = vsyncpa [#allocation6], 0
    %11 = vsyncpa [#allocation4], 0
    // Predicated region
    $region2: #{tpu_custom_call.1} parent=1 // pred_check
      _
    $region3: #{tpu_custom_call.1} parent=1 // pred_check_branch
      %13 = sbr.rel (0) target = $region5
    $region4: #{tpu_custom_call.1} parent=1 // pred_region
      %s15 = ssub.s32 4096, 4096
      %16 = vsyncadd [#allocation3], %s15
      %s18 = sshll.u32 [#allocation2], 4
      %s19 = int_to_ptr.vmem [resolvable:$true] %s18
      %21 = dma.hbm_to_vmem [thread:$0]  %s0, 4096, %s19, [#allocation3]
    $region5: #{tpu_custom_call.1} parent=1 // pred_fallthru
      _
    // Predicated region
    $region6: #{tpu_custom_call.1} parent=1 // pred_check
      _
    $region7: #{tpu_custom_call.1} parent=1 // pred_check_branch
      %23 = sbr.rel (0) target = $region9
    $region8: #{tpu_custom_call.1} parent=1 // pred_region
      %s25 = ssub.s32 8192, 8192
      %26 = vsyncadd [#allocation6], %s25
      %s27 = sshll.u32 [#allocation5], 4
      %s28 = int_to_ptr.vmem [resolvable:$true] %s27
      %33 = dma.hbm_to_vmem [thread:$0]  %s1, 8192, %s28, [#allocation6], 512, 512, 32
    $region9: #{tpu_custom_call.1} parent=1 // pred_fallthru
      _
    // Predicated region
    $region10: #{tpu_custom_call.1} parent=1 // pred_check
      _
    $region11: #{tpu_custom_call.1} parent=1 // pred_check_branch
      %35 = sbr.rel (0) target = $region13
    $region12: #{tpu_custom_call.1} parent=1 // pred_region
      %s37 = ssub.s32 2048, 2048
      %38 = vsyncadd [#allocation6], %s37
      %s39 = sshll.u32 [#allocation7], 4
      %s40 = int_to_ptr.vmem [resolvable:$true] %s39
      %45 = dma.hbm_to_vmem [thread:$0]  %s2, 2048, %s40, [#allocation6], 128, 128, 8
    $region13: #{tpu_custom_call.1} parent=1 // pred_fallthru
      _
    // Predicated region
    $region14: #{tpu_custom_call.1} parent=1 // pred_check
      _
    $region15: #{tpu_custom_call.1} parent=1 // pred_check_branch
      %47 = sbr.rel (0) target = $region17
    $region16: #{tpu_custom_call.1} parent=1 // pred_region
      _
    $region17: #{tpu_custom_call.1} parent=1 // pred_fallthru
      _
    // Predicated region
    $region18: #{tpu_custom_call.1} parent=1 // pred_check
      _
    $region19: #{tpu_custom_call.1} parent=1 // pred_check_branch
      %49 = sbr.rel (0) target = $region21
    $region20: #{tpu_custom_call.1} parent=1 // pred_region
      %50 = dma.done [#allocation3], 4096
    $region21: #{tpu_custom_call.1} parent=1 // pred_fallthru
      _
    // Predicated region
    $region22: #{tpu_custom_call.1} parent=1 // pred_check
      _
    $region23: #{tpu_custom_call.1} parent=1 // pred_check_branch
      %52 = sbr.rel (0) target = $region25
    $region24: #{tpu_custom_call.1} parent=1 // pred_region
      %53 = dma.done [#allocation6], 8192
    $region25: #{tpu_custom_call.1} parent=1 // pred_fallthru
      _
    // Predicated region
    $region26: #{tpu_custom_call.1} parent=1 // pred_check
      _
    $region27: #{tpu_custom_call.1} parent=1 // pred_check_branch
      %55 = sbr.rel (0) target = $region29
    $region28: #{tpu_custom_call.1} parent=1 // pred_region
      %56 = dma.done [#allocation6], 2048
    $region29: #{tpu_custom_call.1} parent=1 // pred_fallthru
      _
    %v57 = vld [vmem:[#allocation5] sm:$0xff]
    %v58 = vld [vmem:[#allocation5 + $0x8] sm:$0xff]
    %v59 = vld [vmem:[#allocation5 + $0x10] sm:$0xff]
    %v60 = vld [vmem:[#allocation5 + $0x18] sm:$0xff]
    %v61 = vld [vmem:[#allocation5 + $0x20] sm:$0xff]
    %v62 = vld [vmem:[#allocation5 + $0x28] sm:$0xff]
    %v63 = vld [vmem:[#allocation5 + $0x30] sm:$0xff]
    %v64 = vld [vmem:[#allocation5 + $0x38] sm:$0xff]
    %v65 = vld [vmem:[#allocation5 + $0x40] sm:$0xff]
    %v66 = vld [vmem:[#allocation5 + $0x48] sm:$0xff]
    %v67 = vld [vmem:[#allocation5 + $0x50] sm:$0xff]
    %v68 = vld [vmem:[#allocation5 + $0x58] sm:$0xff]
    %v69 = vld [vmem:[#allocation5 + $0x60] sm:$0xff]
    %v70 = vld [vmem:[#allocation5 + $0x68] sm:$0xff]
    %v71 = vld [vmem:[#allocation5 + $0x70] sm:$0xff]
    %v72 = vld [vmem:[#allocation5 + $0x78] sm:$0xff]
    %v73 = vld [vmem:[#allocation5 + $0x80] sm:$0xff]
    %v74 = vld [vmem:[#allocation5 + $0x88] sm:$0xff]
    %v75 = vld [vmem:[#allocation5 + $0x90] sm:$0xff]
    %v76 = vld [vmem:[#allocation5 + $0x98] sm:$0xff]
    %v77 = vld [vmem:[#allocation5 + $0xa0] sm:$0xff]
    %v78 = vld [vmem:[#allocation5 + $0xa8] sm:$0xff]
    %v79 = vld [vmem:[#allocation5 + $0xb0] sm:$0xff]
    %v80 = vld [vmem:[#allocation5 + $0xb8] sm:$0xff]
    %v81 = vld [vmem:[#allocation5 + $0xc0] sm:$0xff]
    %v82 = vld [vmem:[#allocation5 + $0xc8] sm:$0xff]
    %v83 = vld [vmem:[#allocation5 + $0xd0] sm:$0xff]
    %v84 = vld [vmem:[#allocation5 + $0xd8] sm:$0xff]
    %v85 = vld [vmem:[#allocation5 + $0xe0] sm:$0xff]
    %v86 = vld [vmem:[#allocation5 + $0xe8] sm:$0xff]
    %v87 = vld [vmem:[#allocation5 + $0xf0] sm:$0xff]
    %v88 = vld [vmem:[#allocation5 + $0xf8] sm:$0xff]
    %v89 = vld [vmem:[#allocation5 + $0x100] sm:$0xff]
    %v90 = vld [vmem:[#allocation5 + $0x108] sm:$0xff]
    %v91 = vld [vmem:[#allocation5 + $0x110] sm:$0xff]
    %v92 = vld [vmem:[#allocation5 + $0x118] sm:$0xff]
    %v93 = vld [vmem:[#allocation5 + $0x120] sm:$0xff]
    %v94 = vld [vmem:[#allocation5 + $0x128] sm:$0xff]
    %v95 = vld [vmem:[#allocation5 + $0x130] sm:$0xff]
    %v96 = vld [vmem:[#allocation5 + $0x138] sm:$0xff]
    %v97 = vld [vmem:[#allocation5 + $0x140] sm:$0xff]
    %v98 = vld [vmem:[#allocation5 + $0x148] sm:$0xff]
    %v99 = vld [vmem:[#allocation5 + $0x150] sm:$0xff]
    %v100 = vld [vmem:[#allocation5 + $0x158] sm:$0xff]
    %v101 = vld [vmem:[#allocation5 + $0x160] sm:$0xff]
    %v102 = vld [vmem:[#allocation5 + $0x168] sm:$0xff]
    %v103 = vld [vmem:[#allocation5 + $0x170] sm:$0xff]
    %v104 = vld [vmem:[#allocation5 + $0x178] sm:$0xff]
    %v105 = vld [vmem:[#allocation5 + $0x180] sm:$0xff]
    %v106 = vld [vmem:[#allocation5 + $0x188] sm:$0xff]
    %v107 = vld [vmem:[#allocation5 + $0x190] sm:$0xff]
    %v108 = vld [vmem:[#allocation5 + $0x198] sm:$0xff]
    %v109 = vld [vmem:[#allocation5 + $0x1a0] sm:$0xff]
    %v110 = vld [vmem:[#allocation5 + $0x1a8] sm:$0xff]
    %v111 = vld [vmem:[#allocation5 + $0x1b0] sm:$0xff]
    %v112 = vld [vmem:[#allocation5 + $0x1b8] sm:$0xff]
    %v113 = vld [vmem:[#allocation5 + $0x1c0] sm:$0xff]
    %v114 = vld [vmem:[#allocation5 + $0x1c8] sm:$0xff]
    %v115 = vld [vmem:[#allocation5 + $0x1d0] sm:$0xff]
    %v116 = vld [vmem:[#allocation5 + $0x1d8] sm:$0xff]
    %v117 = vld [vmem:[#allocation5 + $0x1e0] sm:$0xff]
    %v118 = vld [vmem:[#allocation5 + $0x1e8] sm:$0xff]
    %v119 = vld [vmem:[#allocation5 + $0x1f0] sm:$0xff]
    %v120 = vld [vmem:[#allocation5 + $0x1f8] sm:$0xff]
    %v121 = vld [vmem:[#allocation2] sm:$0xff]
    %v122 = vld [vmem:[#allocation2 + $0x8] sm:$0xff]
    %v123 = vld [vmem:[#allocation2 + $0x10] sm:$0xff]
    %v124 = vld [vmem:[#allocation2 + $0x18] sm:$0xff]
    %125 = vmatprep.subr.mxu0 %v58
    %126 = vmatpush1.msra.mxu0 %v57
    %127 = vmatprep.subr.mxu0 %v62
    %128 = vmatpush1.msra.mxu0 %v61
    %129 = vmatprep.subr.mxu0 %v66
    %130 = vmatpush1.msra.mxu0 %v65
    %131 = vmatprep.subr.mxu0 %v70
    %132 = vmatpush1.msra.mxu0 %v69
    %133 = vmatprep.subr.mxu0 %v74
    %134 = vmatpush1.msra.mxu0 %v73
    %135 = vmatprep.subr.mxu0 %v78
    %136 = vmatpush1.msra.mxu0 %v77
    %137 = vmatprep.subr.mxu0 %v82
    %138 = vmatpush1.msra.mxu0 %v81
    %139 = vmatprep.subr.mxu0 %v86
    %140 = vmatpush1.msra.mxu0 %v85
    %141 = vmatprep.subr.mxu0 %v90
    %142 = vmatpush1.msra.mxu0 %v89
    %143 = vmatprep.subr.mxu0 %v94
    %144 = vmatpush1.msra.mxu0 %v93
    %145 = vmatprep.subr.mxu0 %v98
    %146 = vmatpush1.msra.mxu0 %v97
    %147 = vmatprep.subr.mxu0 %v102
    %148 = vmatpush1.msra.mxu0 %v101
    %149 = vmatprep.subr.mxu0 %v106
    %150 = vmatpush1.msra.mxu0 %v105
    %151 = vmatprep.subr.mxu0 %v110
    %152 = vmatpush1.msra.mxu0 %v109
    %153 = vmatprep.subr.mxu0 %v114
    %154 = vmatpush1.msra.mxu0 %v113
    %155 = vmatprep.subr.mxu0 %v118
    %156 = vmatpush1.msra.mxu0 %v117
    %157 = vmatprep.subr.mxu0 0.0
    %158 = vmatpush1.msra.mxu0 0.0
    %159 = vmatprep.subr.mxu0 0.0
    %160 = vmatpush1.msra.mxu0 0.0
    %161 = vmatprep.subr.mxu0 0.0
    %162 = vmatpush1.msra.mxu0 0.0
    %163 = vmatprep.subr.mxu0 0.0
    %164 = vmatpush1.msra.mxu0 0.0
    %165 = vmatprep.subr.mxu0 0.0
    %166 = vmatpush1.msra.mxu0 0.0
    %167 = vmatprep.subr.mxu0 0.0
    %168 = vmatpush1.msra.mxu0 0.0
    %169 = vmatprep.subr.mxu0 0.0
    %170 = vmatpush1.msra.mxu0 0.0
    %171 = vmatprep.subr.mxu0 0.0
    %172 = vmatpush1.msra.mxu0 0.0
    %173 = vmatprep.subr.mxu0 0.0
    %174 = vmatpush1.msra.mxu0 0.0
    %175 = vmatprep.subr.mxu0 0.0
    %176 = vmatpush1.msra.mxu0 0.0
    %177 = vmatprep.subr.mxu0 0.0
    %178 = vmatpush1.msra.mxu0 0.0
    %179 = vmatprep.subr.mxu0 0.0
    %180 = vmatpush1.msra.mxu0 0.0
    %181 = vmatprep.subr.mxu0 0.0
    %182 = vmatpush1.msra.mxu0 0.0
    %183 = vmatprep.subr.mxu0 0.0
    %184 = vmatpush1.msra.mxu0 0.0
    %185 = vmatprep.subr.mxu0 0.0
    %186 = vmatpush1.msra.mxu0 0.0
    %187 = vmatprep.subr.mxu0 0.0
    %188 = vmatpush1.msra.mxu0 0.0
    %189 = vmatprep.mubr.f32.mxu0 0.0
    %190 = vmatmul.mubr.f32.gmra.mrb[0].mxu0 0.0
    %v191 = vpop.f32.mrb[0].mxu0
    %v192 = vadd.f32 0.0, %v191
    %v193 = vpop.f32.mrb[0].mxu0
    %v194 = vadd.f32 0.0, %v193
    %195 = vdwg.mxu0
    %196 = vmatprep.subr.mxu0 %v60
    %197 = vmatpush1.msra.mxu0 %v59
    %198 = vmatprep.subr.mxu0 %v64
    %199 = vmatpush1.msra.mxu0 %v63
    %200 = vmatprep.subr.mxu0 %v68
    %201 = vmatpush1.msra.mxu0 %v67
    %202 = vmatprep.subr.mxu0 %v72
    %203 = vmatpush1.msra.mxu0 %v71
    %204 = vmatprep.subr.mxu0 %v76
    %205 = vmatpush1.msra.mxu0 %v75
    %206 = vmatprep.subr.mxu0 %v80
    %207 = vmatpush1.msra.mxu0 %v79
    %208 = vmatprep.subr.mxu0 %v84
    %209 = vmatpush1.msra.mxu0 %v83
    %210 = vmatprep.subr.mxu0 %v88
    %211 = vmatpush1.msra.mxu0 %v87
    %212 = vmatprep.subr.mxu0 %v92
    %213 = vmatpush1.msra.mxu0 %v91
    %214 = vmatprep.subr.mxu0 %v96
    %215 = vmatpush1.msra.mxu0 %v95
    %216 = vmatprep.subr.mxu0 %v100
    %217 = vmatpush1.msra.mxu0 %v99
    %218 = vmatprep.subr.mxu0 %v104
    %219 = vmatpush1.msra.mxu0 %v103
    %220 = vmatprep.subr.mxu0 %v108
    %221 = vmatpush1.msra.mxu0 %v107
    %222 = vmatprep.subr.mxu0 %v112
    %223 = vmatpush1.msra.mxu0 %v111
    %224 = vmatprep.subr.mxu0 %v116
    %225 = vmatpush1.msra.mxu0 %v115
    %226 = vmatprep.subr.mxu0 %v120
    %227 = vmatpush1.msra.mxu0 %v119
    %228 = vmatprep.subr.mxu0 0.0
    %229 = vmatpush1.msra.mxu0 0.0
    %230 = vmatprep.subr.mxu0 0.0
    %231 = vmatpush1.msra.mxu0 0.0
    %232 = vmatprep.subr.mxu0 0.0
    %233 = vmatpush1.msra.mxu0 0.0
    %234 = vmatprep.subr.mxu0 0.0
    %235 = vmatpush1.msra.mxu0 0.0
    %236 = vmatprep.subr.mxu0 0.0
    %237 = vmatpush1.msra.mxu0 0.0
    %238 = vmatprep.subr.mxu0 0.0
    %239 = vmatpush1.msra.mxu0 0.0
    %240 = vmatprep.subr.mxu0 0.0
    %241 = vmatpush1.msra.mxu0 0.0
    %242 = vmatprep.subr.mxu0 0.0
    %243 = vmatpush1.msra.mxu0 0.0
    %244 = vmatprep.subr.mxu0 0.0
    %245 = vmatpush1.msra.mxu0 0.0
    %246 = vmatprep.subr.mxu0 0.0
    %247 = vmatpush1.msra.mxu0 0.0
    %248 = vmatprep.subr.mxu0 0.0
    %249 = vmatpush1.msra.mxu0 0.0
    %250 = vmatprep.subr.mxu0 0.0
    %251 = vmatpush1.msra.mxu0 0.0
    %252 = vmatprep.subr.mxu0 0.0
    %253 = vmatpush1.msra.mxu0 0.0
    %254 = vmatprep.subr.mxu0 0.0
    %255 = vmatpush1.msra.mxu0 0.0
    %256 = vmatprep.subr.mxu0 0.0
    %257 = vmatpush1.msra.mxu0 0.0
    %258 = vmatprep.subr.mxu0 0.0
    %259 = vmatpush1.msra.mxu0 0.0
    %260 = vmatprep.mubr.f32.mxu0 0.0
    %261 = vmatmul.mubr.f32.gmra.mrb[0].mxu0 0.0
    %v262 = vpop.f32.mrb[0].mxu0
    %v263 = vadd.f32 0.0, %v262
    %v264 = vpop.f32.mrb[0].mxu0
    %v265 = vadd.f32 0.0, %v264
    %266 = vdwg.mxu0
    %v267 = vadd.f32 %v121, %v192
    %v268 = vadd.f32 %v122, %v194
    %v269 = vadd.f32 %v123, %v263
    %v270 = vadd.f32 %v124, %v265
    %v271 = vxor.u32 %v267, 2147483648
    %v272 = vmul.f32 %v271, 1.442695
    %v273 = vpow.pop %v272
    %v274 = vadd.f32 %v273, 1.0
    %v275 = vrcp.pop %v274
    %v276 = vmul.f32 1.0, %v275
    %v277 = vxor.u32 %v268, 2147483648
    %v278 = vmul.f32 %v277, 1.442695
    %v279 = vpow.pop %v278
    %v280 = vadd.f32 %v279, 1.0
    %v281 = vrcp.pop %v280
    %v282 = vmul.f32 1.0, %v281
    %v283 = vtanh.pop %v269
    %v284 = vxor.u32 %v270, 2147483648
    %v285 = vmul.f32 %v284, 1.442695
    %v286 = vpow.pop %v285
    %v287 = vadd.f32 %v286, 1.0
    %v288 = vrcp.pop %v287
    %v289 = vmul.f32 1.0, %v288
    %v290 = vmul.f32 %v282, 0.0
    %v291 = vmul.f32 %v276, %v283
    %v292 = vadd.f32 %v290, %v291
    %v293 = vtanh.pop %v292
    %v294 = vmul.f32 %v289, %v293
    %v295 = vld [vmem:[#allocation2 + $0x20] sm:$0xff]
    %v296 = vld [vmem:[#allocation2 + $0x28] sm:$0xff]
    %v297 = vld [vmem:[#allocation2 + $0x30] sm:$0xff]
    %v298 = vld [vmem:[#allocation2 + $0x38] sm:$0xff]
    %299 = vmatprep.subr.mxu0 %v58
    %300 = vmatpush1.msra.mxu0 %v57
    %301 = vmatprep.subr.mxu0 %v62
    %302 = vmatpush1.msra.mxu0 %v61
    %303 = vmatprep.subr.mxu0 %v66
    %304 = vmatpush1.msra.mxu0 %v65
    %305 = vmatprep.subr.mxu0 %v70
    %306 = vmatpush1.msra.mxu0 %v69
    %307 = vmatprep.subr.mxu0 %v74
    %308 = vmatpush1.msra.mxu0 %v73
    %309 = vmatprep.subr.mxu0 %v78
    %310 = vmatpush1.msra.mxu0 %v77
    %311 = vmatprep.subr.mxu0 %v82
    %312 = vmatpush1.msra.mxu0 %v81
    %313 = vmatprep.subr.mxu0 %v86
    %314 = vmatpush1.msra.mxu0 %v85
    %315 = vmatprep.subr.mxu0 %v90
    %316 = vmatpush1.msra.mxu0 %v89
    %317 = vmatprep.subr.mxu0 %v94
    %318 = vmatpush1.msra.mxu0 %v93
    %319 = vmatprep.subr.mxu0 %v98
    %320 = vmatpush1.msra.mxu0 %v97
    %321 = vmatprep.subr.mxu0 %v102
    %322 = vmatpush1.msra.mxu0 %v101
    %323 = vmatprep.subr.mxu0 %v106
    %324 = vmatpush1.msra.mxu0 %v105
    %325 = vmatprep.subr.mxu0 %v110
    %326 = vmatpush1.msra.mxu0 %v109
    %327 = vmatprep.subr.mxu0 %v114
    %328 = vmatpush1.msra.mxu0 %v113
    %329 = vmatprep.subr.mxu0 %v118
    %330 = vmatpush1.msra.mxu0 %v117
    %331 = vmatprep.subr.mxu0 0.0
    %332 = vmatpush1.msra.mxu0 0.0
    %333 = vmatprep.subr.mxu0 0.0
    %334 = vmatpush1.msra.mxu0 0.0
    %335 = vmatprep.subr.mxu0 0.0
    %336 = vmatpush1.msra.mxu0 0.0
    %337 = vmatprep.subr.mxu0 0.0
    %338 = vmatpush1.msra.mxu0 0.0
    %339 = vmatprep.subr.mxu0 0.0
    %340 = vmatpush1.msra.mxu0 0.0
    %341 = vmatprep.subr.mxu0 0.0
    %342 = vmatpush1.msra.mxu0 0.0
    %343 = vmatprep.subr.mxu0 0.0
    %344 = vmatpush1.msra.mxu0 0.0
    %345 = vmatprep.subr.mxu0 0.0
    %346 = vmatpush1.msra.mxu0 0.0
    %347 = vmatprep.subr.mxu0 0.0
    %348 = vmatpush1.msra.mxu0 0.0
    %349 = vmatprep.subr.mxu0 0.0
    %350 = vmatpush1.msra.mxu0 0.0
    %351 = vmatprep.subr.mxu0 0.0
    %352 = vmatpush1.msra.mxu0 0.0
    %353 = vmatprep.subr.mxu0 0.0
    %354 = vmatpush1.msra.mxu0 0.0
    %355 = vmatprep.subr.mxu0 0.0
    %356 = vmatpush1.msra.mxu0 0.0
    %357 = vmatprep.subr.mxu0 0.0
    %358 = vmatpush1.msra.mxu0 0.0
    %359 = vmatprep.subr.mxu0 0.0
    %360 = vmatpush1.msra.mxu0 0.0
    %361 = vmatprep.subr.mxu0 0.0
    %362 = vmatpush1.msra.mxu0 0.0
    %363 = vmatprep.mubr.f32.mxu0 0.0
    %364 = vmatmul.mubr.f32.gmra.mrb[0].mxu0 %v294
    %v365 = vpop.f32.mrb[0].mxu0
    %v366 = vadd.f32 0.0, %v365
    %v367 = vpop.f32.mrb[0].mxu0
    %v368 = vadd.f32 0.0, %v367
    %369 = vdwg.mxu0
    %370 = vmatprep.subr.mxu0 %v60
    %371 = vmatpush1.msra.mxu0 %v59
    %372 = vmatprep.subr.mxu0 %v64
    %373 = vmatpush1.msra.mxu0 %v63
    %374 = vmatprep.subr.mxu0 %v68
    %375 = vmatpush1.msra.mxu0 %v67
    %376 = vmatprep.subr.mxu0 %v72
    %377 = vmatpush1.msra.mxu0 %v71
    %378 = vmatprep.subr.mxu0 %v76
    %379 = vmatpush1.msra.mxu0 %v75
    %380 = vmatprep.subr.mxu0 %v80
    %381 = vmatpush1.msra.mxu0 %v79
    %382 = vmatprep.subr.mxu0 %v84
    %383 = vmatpush1.msra.mxu0 %v83
    %384 = vmatprep.subr.mxu0 %v88
    %385 = vmatpush1.msra.mxu0 %v87
    %386 = vmatprep.subr.mxu0 %v92
    %387 = vmatpush1.msra.mxu0 %v91
    %388 = vmatprep.subr.mxu0 %v96
    %389 = vmatpush1.msra.mxu0 %v95
    %390 = vmatprep.subr.mxu0 %v100
    %391 = vmatpush1.msra.mxu0 %v99
    %392 = vmatprep.subr.mxu0 %v104
    %393 = vmatpush1.msra.mxu0 %v103
    %394 = vmatprep.subr.mxu0 %v108
    %395 = vmatpush1.msra.mxu0 %v107
    %396 = vmatprep.subr.mxu0 %v112
    %397 = vmatpush1.msra.mxu0 %v111
    %398 = vmatprep.subr.mxu0 %v116
    %399 = vmatpush1.msra.mxu0 %v115
    %400 = vmatprep.subr.mxu0 %v120
    %401 = vmatpush1.msra.mxu0 %v119
    %402 = vmatprep.subr.mxu0 0.0
    %403 = vmatpush1.msra.mxu0 0.0
    %404 = vmatprep.subr.mxu0 0.0
    %405 = vmatpush1.msra.mxu0 0.0
    %406 = vmatprep.subr.mxu0 0.0
    %407 = vmatpush1.msra.mxu0 0.0
    %408 = vmatprep.subr.mxu0 0.0
    %409 = vmatpush1.msra.mxu0 0.0
    %410 = vmatprep.subr.mxu0 0.0
    %411 = vmatpush1.msra.mxu0 0.0
    %412 = vmatprep.subr.mxu0 0.0
    %413 = vmatpush1.msra.mxu0 0.0
    %414 = vmatprep.subr.mxu0 0.0
    %415 = vmatpush1.msra.mxu0 0.0
    %416 = vmatprep.subr.mxu0 0.0
    %417 = vmatpush1.msra.mxu0 0.0
    %418 = vmatprep.subr.mxu0 0.0
    %419 = vmatpush1.msra.mxu0 0.0
    %420 = vmatprep.subr.mxu0 0.0
    %421 = vmatpush1.msra.mxu0 0.0
    %422 = vmatprep.subr.mxu0 0.0
    %423 = vmatpush1.msra.mxu0 0.0
    %424 = vmatprep.subr.mxu0 0.0
    %425 = vmatpush1.msra.mxu0 0.0
    %426 = vmatprep.subr.mxu0 0.0
    %427 = vmatpush1.msra.mxu0 0.0
    %428 = vmatprep.subr.mxu0 0.0
    %429 = vmatpush1.msra.mxu0 0.0
    %430 = vmatprep.subr.mxu0 0.0
    %431 = vmatpush1.msra.mxu0 0.0
    %432 = vmatprep.subr.mxu0 0.0
    %433 = vmatpush1.msra.mxu0 0.0
    %434 = vmatprep.mubr.f32.mxu0 0.0
    %435 = vmatmul.mubr.f32.gmra.mrb[0].mxu0 %v294
    %v436 = vpop.f32.mrb[0].mxu0
    %v437 = vadd.f32 0.0, %v436
    %v438 = vpop.f32.mrb[0].mxu0
    %v439 = vadd.f32 0.0, %v438
    %440 = vdwg.mxu0
    %v441 = vadd.f32 %v295, %v366
    %v442 = vadd.f32 %v296, %v368
    %v443 = vadd.f32 %v297, %v437
    %v444 = vadd.f32 %v298, %v439
    %v445 = vxor.u32 %v441, 2147483648
    %v446 = vmul.f32 %v445, 1.442695
    %v447 = vpow.pop %v446
    %v448 = vadd.f32 %v447, 1.0
    %v449 = vrcp.pop %v448
    %v450 = vmul.f32 1.0, %v449
    %v451 = vxor.u32 %v442, 2147483648
    %v452 = vmul.f32 %v451, 1.442695
    %v453 = vpow.pop %v452
    %v454 = vadd.f32 %v453, 1.0
    %v455 = vrcp.pop %v454
    %v456 = vmul.f32 1.0, %v455
    %v457 = vtanh.pop %v443
    %v458 = vxor.u32 %v444, 2147483648
    %v459 = vmul.f32 %v458, 1.442695
    %v460 = vpow.pop %v459
    %v461 = vadd.f32 %v460, 1.0
    %v462 = vrcp.pop %v461
    %v463 = vmul.f32 1.0, %v462
    %v464 = vmul.f32 %v456, %v292
    %v465 = vmul.f32 %v450, %v457
    %v466 = vadd.f32 %v464, %v465
    %v467 = vtanh.pop %v466
    %v468 = vmul.f32 %v463, %v467
    %v469 = vld [vmem:[#allocation2 + $0x40] sm:$0xff]
    %v470 = vld [vmem:[#allocation2 + $0x48] sm:$0xff]
    %v471 = vld [vmem:[#allocation2 + $0x50] sm:$0xff]
    %v472 = vld [vmem:[#allocation2 + $0x58] sm:$0xff]
    %473 = vmatprep.subr.mxu0 %v58
    %474 = vmatpush1.msra.mxu0 %v57
    %475 = vmatprep.subr.mxu0 %v62
    %476 = vmatpush1.msra.mxu0 %v61
    %477 = vmatprep.subr.mxu0 %v66
    %478 = vmatpush1.msra.mxu0 %v65
    %479 = vmatprep.subr.mxu0 %v70
    %480 = vmatpush1.msra.mxu0 %v69
    %481 = vmatprep.subr.mxu0 %v74
    %482 = vmatpush1.msra.mxu0 %v73
    %483 = vmatprep.subr.mxu0 %v78
    %484 = vmatpush1.msra.mxu0 %v77
    %485 = vmatprep.subr.mxu0 %v82
    %486 = vmatpush1.msra.mxu0 %v81
    %487 = vmatprep.subr.mxu0 %v86
    %488 = vmatpush1.msra.mxu0 %v85
    %489 = vmatprep.subr.mxu0 %v90
    %490 = vmatpush1.msra.mxu0 %v89
    %491 = vmatprep.subr.mxu0 %v94
    %492 = vmatpush1.msra.mxu0 %v93
    %493 = vmatprep.subr.mxu0 %v98
    %494 = vmatpush1.msra.mxu0 %v97
    %495 = vmatprep.subr.mxu0 %v102
    %496 = vmatpush1.msra.mxu0 %v101
    %497 = vmatprep.subr.mxu0 %v106
    %498 = vmatpush1.msra.mxu0 %v105
    %499 = vmatprep.subr.mxu0 %v110
    %500 = vmatpush1.msra.mxu0 %v109
    %501 = vmatprep.subr.mxu0 %v114
    %502 = vmatpush1.msra.mxu0 %v113
    %503 = vmatprep.subr.mxu0 %v118
    %504 = vmatpush1.msra.mxu0 %v117
    %505 = vmatprep.subr.mxu0 0.0
    %506 = vmatpush1.msra.mxu0 0.0
    %507 = vmatprep.subr.mxu0 0.0
    %508 = vmatpush1.msra.mxu0 0.0
    %509 = vmatprep.subr.mxu0 0.0
    %510 = vmatpush1.msra.mxu0 0.0
    %511 = vmatprep.subr.mxu0 0.0
    %512 = vmatpush1.msra.mxu0 0.0
    %513 = vmatprep.subr.mxu0 0.0
    %514 = vmatpush1.msra.mxu0 0.0
    %515 = vmatprep.subr.mxu0 0.0
    %516 = vmatpush1.msra.mxu0 0.0
    %517 = vmatprep.subr.mxu0 0.0
    %518 = vmatpush1.msra.mxu0 0.0
    %519 = vmatprep.subr.mxu0 0.0
    %520 = vmatpush1.msra.mxu0 0.0
    %521 = vmatprep.subr.mxu0 0.0
    %522 = vmatpush1.msra.mxu0 0.0
    %523 = vmatprep.subr.mxu0 0.0
    %524 = vmatpush1.msra.mxu0 0.0
    %525 = vmatprep.subr.mxu0 0.0
    %526 = vmatpush1.msra.mxu0 0.0
    %527 = vmatprep.subr.mxu0 0.0
    %528 = vmatpush1.msra.mxu0 0.0
    %529 = vmatprep.subr.mxu0 0.0
    %530 = vmatpush1.msra.mxu0 0.0
    %531 = vmatprep.subr.mxu0 0.0
    %532 = vmatpush1.msra.mxu0 0.0
    %533 = vmatprep.subr.mxu0 0.0
    %534 = vmatpush1.msra.mxu0 0.0
    %535 = vmatprep.subr.mxu0 0.0
    %536 = vmatpush1.msra.mxu0 0.0
    %537 = vmatprep.mubr.f32.mxu0 0.0
    %538 = vmatmul.mubr.f32.gmra.mrb[0].mxu0 %v468
    %v539 = vpop.f32.mrb[0].mxu0
    %v540 = vadd.f32 0.0, %v539
    %v541 = vpop.f32.mrb[0].mxu0
    %v542 = vadd.f32 0.0, %v541
    %543 = vdwg.mxu0
    %544 = vmatprep.subr.mxu0 %v60
    %545 = vmatpush1.msra.mxu0 %v59
    %546 = vmatprep.subr.mxu0 %v64
    %547 = vmatpush1.msra.mxu0 %v63
    %548 = vmatprep.subr.mxu0 %v68
    %549 = vmatpush1.msra.mxu0 %v67
    %550 = vmatprep.subr.mxu0 %v72
    %551 = vmatpush1.msra.mxu0 %v71
    %552 = vmatprep.subr.mxu0 %v76
    %553 = vmatpush1.msra.mxu0 %v75
    %554 = vmatprep.subr.mxu0 %v80
    %555 = vmatpush1.msra.mxu0 %v79
    %556 = vmatprep.subr.mxu0 %v84
    %557 = vmatpush1.msra.mxu0 %v83
    %558 = vmatprep.subr.mxu0 %v88
    %559 = vmatpush1.msra.mxu0 %v87
    %560 = vmatprep.subr.mxu0 %v92
    %561 = vmatpush1.msra.mxu0 %v91
    %562 = vmatprep.subr.mxu0 %v96
    %563 = vmatpush1.msra.mxu0 %v95
    %564 = vmatprep.subr.mxu0 %v100
    %565 = vmatpush1.msra.mxu0 %v99
    %566 = vmatprep.subr.mxu0 %v104
    %567 = vmatpush1.msra.mxu0 %v103
    %568 = vmatprep.subr.mxu0 %v108
    %569 = vmatpush1.msra.mxu0 %v107
    %570 = vmatprep.subr.mxu0 %v112
    %571 = vmatpush1.msra.mxu0 %v111
    %572 = vmatprep.subr.mxu0 %v116
    %573 = vmatpush1.msra.mxu0 %v115
    %574 = vmatprep.subr.mxu0 %v120
    %575 = vmatpush1.msra.mxu0 %v119
    %576 = vmatprep.subr.mxu0 0.0
    %577 = vmatpush1.msra.mxu0 0.0
    %578 = vmatprep.subr.mxu0 0.0
    %579 = vmatpush1.msra.mxu0 0.0
    %580 = vmatprep.subr.mxu0 0.0
    %581 = vmatpush1.msra.mxu0 0.0
    %582 = vmatprep.subr.mxu0 0.0
    %583 = vmatpush1.msra.mxu0 0.0
    %584 = vmatprep.subr.mxu0 0.0
    %585 = vmatpush1.msra.mxu0 0.0
    %586 = vmatprep.subr.mxu0 0.0
    %587 = vmatpush1.msra.mxu0 0.0
    %588 = vmatprep.subr.mxu0 0.0
    %589 = vmatpush1.msra.mxu0 0.0
    %590 = vmatprep.subr.mxu0 0.0
    %591 = vmatpush1.msra.mxu0 0.0
    %592 = vmatprep.subr.mxu0 0.0
    %593 = vmatpush1.msra.mxu0 0.0
    %594 = vmatprep.subr.mxu0 0.0
    %595 = vmatpush1.msra.mxu0 0.0
    %596 = vmatprep.subr.mxu0 0.0
    %597 = vmatpush1.msra.mxu0 0.0
    %598 = vmatprep.subr.mxu0 0.0
    %599 = vmatpush1.msra.mxu0 0.0
    %600 = vmatprep.subr.mxu0 0.0
    %601 = vmatpush1.msra.mxu0 0.0
    %602 = vmatprep.subr.mxu0 0.0
    %603 = vmatpush1.msra.mxu0 0.0
    %604 = vmatprep.subr.mxu0 0.0
    %605 = vmatpush1.msra.mxu0 0.0
    %606 = vmatprep.subr.mxu0 0.0
    %607 = vmatpush1.msra.mxu0 0.0
    %608 = vmatprep.mubr.f32.mxu0 0.0
    %609 = vmatmul.mubr.f32.gmra.mrb[0].mxu0 %v468
    %v610 = vpop.f32.mrb[0].mxu0
    %v611 = vadd.f32 0.0, %v610
    %v612 = vpop.f32.mrb[0].mxu0
    %v613 = vadd.f32 0.0, %v612
    %614 = vdwg.mxu0
    %v615 = vadd.f32 %v469, %v540
    %v616 = vadd.f32 %v470, %v542
    %v617 = vadd.f32 %v471, %v611
    %v618 = vadd.f32 %v472, %v613
    %v619 = vxor.u32 %v615, 2147483648
    %v620 = vmul.f32 %v619, 1.442695
    %v621 = vpow.pop %v620
    %v622 = vadd.f32 %v621, 1.0
    %v623 = vrcp.pop %v622
    %v624 = vmul.f32 1.0, %v623
    %v625 = vxor.u32 %v616, 2147483648
    %v626 = vmul.f32 %v625, 1.442695
    %v627 = vpow.pop %v626
    %v628 = vadd.f32 %v627, 1.0
    %v629 = vrcp.pop %v628
    %v630 = vmul.f32 1.0, %v629
    %v631 = vtanh.pop %v617
    %v632 = vxor.u32 %v618, 2147483648
    %v633 = vmul.f32 %v632, 1.442695
    %v634 = vpow.pop %v633
    %v635 = vadd.f32 %v634, 1.0
    %v636 = vrcp.pop %v635
    %v637 = vmul.f32 1.0, %v636
    %v638 = vmul.f32 %v630, %v466
    %v639 = vmul.f32 %v624, %v631
    %v640 = vadd.f32 %v638, %v639
    %v641 = vtanh.pop %v640
    %v642 = vmul.f32 %v637, %v641
    %v643 = vld [vmem:[#allocation2 + $0x60] sm:$0xff]
    %v644 = vld [vmem:[#allocation2 + $0x68] sm:$0xff]
    %v645 = vld [vmem:[#allocation2 + $0x70] sm:$0xff]
    %v646 = vld [vmem:[#allocation2 + $0x78] sm:$0xff]
    %647 = vmatprep.subr.mxu0 %v58
    %648 = vmatpush1.msra.mxu0 %v57
    %649 = vmatprep.subr.mxu0 %v62
    %650 = vmatpush1.msra.mxu0 %v61
    %651 = vmatprep.subr.mxu0 %v66
    %652 = vmatpush1.msra.mxu0 %v65
    %653 = vmatprep.subr.mxu0 %v70
    %654 = vmatpush1.msra.mxu0 %v69
    %655 = vmatprep.subr.mxu0 %v74
    %656 = vmatpush1.msra.mxu0 %v73
    %657 = vmatprep.subr.mxu0 %v78
    %658 = vmatpush1.msra.mxu0 %v77
    %659 = vmatprep.subr.mxu0 %v82
    %660 = vmatpush1.msra.mxu0 %v81
    %661 = vmatprep.subr.mxu0 %v86
    %662 = vmatpush1.msra.mxu0 %v85
    %663 = vmatprep.subr.mxu0 %v90
    %664 = vmatpush1.msra.mxu0 %v89
    %665 = vmatprep.subr.mxu0 %v94
    %666 = vmatpush1.msra.mxu0 %v93
    %667 = vmatprep.subr.mxu0 %v98
    %668 = vmatpush1.msra.mxu0 %v97
    %669 = vmatprep.subr.mxu0 %v102
    %670 = vmatpush1.msra.mxu0 %v101
    %671 = vmatprep.subr.mxu0 %v106
    %672 = vmatpush1.msra.mxu0 %v105
    %673 = vmatprep.subr.mxu0 %v110
    %674 = vmatpush1.msra.mxu0 %v109
    %675 = vmatprep.subr.mxu0 %v114
    %676 = vmatpush1.msra.mxu0 %v113
    %677 = vmatprep.subr.mxu0 %v118
    %678 = vmatpush1.msra.mxu0 %v117
    %679 = vmatprep.subr.mxu0 0.0
    %680 = vmatpush1.msra.mxu0 0.0
    %681 = vmatprep.subr.mxu0 0.0
    %682 = vmatpush1.msra.mxu0 0.0
    %683 = vmatprep.subr.mxu0 0.0
    %684 = vmatpush1.msra.mxu0 0.0
    %685 = vmatprep.subr.mxu0 0.0
    %686 = vmatpush1.msra.mxu0 0.0
    %687 = vmatprep.subr.mxu0 0.0
    %688 = vmatpush1.msra.mxu0 0.0
    %689 = vmatprep.subr.mxu0 0.0
    %690 = vmatpush1.msra.mxu0 0.0
    %691 = vmatprep.subr.mxu0 0.0
    %692 = vmatpush1.msra.mxu0 0.0
    %693 = vmatprep.subr.mxu0 0.0
    %694 = vmatpush1.msra.mxu0 0.0
    %695 = vmatprep.subr.mxu0 0.0
    %696 = vmatpush1.msra.mxu0 0.0
    %697 = vmatprep.subr.mxu0 0.0
    %698 = vmatpush1.msra.mxu0 0.0
    %699 = vmatprep.subr.mxu0 0.0
    %700 = vmatpush1.msra.mxu0 0.0
    %701 = vmatprep.subr.mxu0 0.0
    %702 = vmatpush1.msra.mxu0 0.0
    %703 = vmatprep.subr.mxu0 0.0
    %704 = vmatpush1.msra.mxu0 0.0
    %705 = vmatprep.subr.mxu0 0.0
    %706 = vmatpush1.msra.mxu0 0.0
    %707 = vmatprep.subr.mxu0 0.0
    %708 = vmatpush1.msra.mxu0 0.0
    %709 = vmatprep.subr.mxu0 0.0
    %710 = vmatpush1.msra.mxu0 0.0
    %711 = vmatprep.mubr.f32.mxu0 0.0
    %712 = vmatmul.mubr.f32.gmra.mrb[0].mxu0 %v642
    %v713 = vpop.f32.mrb[0].mxu0
    %v714 = vadd.f32 0.0, %v713
    %v715 = vpop.f32.mrb[0].mxu0
    %v716 = vadd.f32 0.0, %v715
    %717 = vdwg.mxu0
    %718 = vmatprep.subr.mxu0 %v60
    %719 = vmatpush1.msra.mxu0 %v59
    %720 = vmatprep.subr.mxu0 %v64
    %721 = vmatpush1.msra.mxu0 %v63
    %722 = vmatprep.subr.mxu0 %v68
    %723 = vmatpush1.msra.mxu0 %v67
    %724 = vmatprep.subr.mxu0 %v72
    %725 = vmatpush1.msra.mxu0 %v71
    %726 = vmatprep.subr.mxu0 %v76
    %727 = vmatpush1.msra.mxu0 %v75
    %728 = vmatprep.subr.mxu0 %v80
    %729 = vmatpush1.msra.mxu0 %v79
    %730 = vmatprep.subr.mxu0 %v84
    %731 = vmatpush1.msra.mxu0 %v83
    %732 = vmatprep.subr.mxu0 %v88
    %733 = vmatpush1.msra.mxu0 %v87
    %734 = vmatprep.subr.mxu0 %v92
    %735 = vmatpush1.msra.mxu0 %v91
    %736 = vmatprep.subr.mxu0 %v96
    %737 = vmatpush1.msra.mxu0 %v95
    %738 = vmatprep.subr.mxu0 %v100
    %739 = vmatpush1.msra.mxu0 %v99
    %740 = vmatprep.subr.mxu0 %v104
    %741 = vmatpush1.msra.mxu0 %v103
    %742 = vmatprep.subr.mxu0 %v108
    %743 = vmatpush1.msra.mxu0 %v107
    %744 = vmatprep.subr.mxu0 %v112
    %745 = vmatpush1.msra.mxu0 %v111
    %746 = vmatprep.subr.mxu0 %v116
    %747 = vmatpush1.msra.mxu0 %v115
    %748 = vmatprep.subr.mxu0 %v120
    %749 = vmatpush1.msra.mxu0 %v119
    %750 = vmatprep.subr.mxu0 0.0
    %751 = vmatpush1.msra.mxu0 0.0
    %752 = vmatprep.subr.mxu0 0.0
    %753 = vmatpush1.msra.mxu0 0.0
    %754 = vmatprep.subr.mxu0 0.0
    %755 = vmatpush1.msra.mxu0 0.0
    %756 = vmatprep.subr.mxu0 0.0
    %757 = vmatpush1.msra.mxu0 0.0
    %758 = vmatprep.subr.mxu0 0.0
    %759 = vmatpush1.msra.mxu0 0.0
    %760 = vmatprep.subr.mxu0 0.0
    %761 = vmatpush1.msra.mxu0 0.0
    %762 = vmatprep.subr.mxu0 0.0
    %763 = vmatpush1.msra.mxu0 0.0
    %764 = vmatprep.subr.mxu0 0.0
    %765 = vmatpush1.msra.mxu0 0.0
    %766 = vmatprep.subr.mxu0 0.0
    %767 = vmatpush1.msra.mxu0 0.0
    %768 = vmatprep.subr.mxu0 0.0
    %769 = vmatpush1.msra.mxu0 0.0
    %770 = vmatprep.subr.mxu0 0.0
    %771 = vmatpush1.msra.mxu0 0.0
    %772 = vmatprep.subr.mxu0 0.0
    %773 = vmatpush1.msra.mxu0 0.0
    %774 = vmatprep.subr.mxu0 0.0
    %775 = vmatpush1.msra.mxu0 0.0
    %776 = vmatprep.subr.mxu0 0.0
    %777 = vmatpush1.msra.mxu0 0.0
    %778 = vmatprep.subr.mxu0 0.0
    %779 = vmatpush1.msra.mxu0 0.0
    %780 = vmatprep.subr.mxu0 0.0
    %781 = vmatpush1.msra.mxu0 0.0
    %782 = vmatprep.mubr.f32.mxu0 0.0
    %783 = vmatmul.mubr.f32.gmra.mrb[0].mxu0 %v642
    %v784 = vpop.f32.mrb[0].mxu0
    %v785 = vadd.f32 0.0, %v784
    %v786 = vpop.f32.mrb[0].mxu0
    %v787 = vadd.f32 0.0, %v786
    %788 = vdwg.mxu0
    %v789 = vadd.f32 %v643, %v714
    %v790 = vadd.f32 %v644, %v716
    %v791 = vadd.f32 %v645, %v785
    %v792 = vadd.f32 %v646, %v787
    %v793 = vxor.u32 %v789, 2147483648
    %v794 = vmul.f32 %v793, 1.442695
    %v795 = vpow.pop %v794
    %v796 = vadd.f32 %v795, 1.0
    %v797 = vrcp.pop %v796
    %v798 = vmul.f32 1.0, %v797
    %v799 = vxor.u32 %v790, 2147483648
    %v800 = vmul.f32 %v799, 1.442695
    %v801 = vpow.pop %v800
    %v802 = vadd.f32 %v801, 1.0
    %v803 = vrcp.pop %v802
    %v804 = vmul.f32 1.0, %v803
    %v805 = vtanh.pop %v791
    %v806 = vxor.u32 %v792, 2147483648
    %v807 = vmul.f32 %v806, 1.442695
    %v808 = vpow.pop %v807
    %v809 = vadd.f32 %v808, 1.0
    %v810 = vrcp.pop %v809
    %v811 = vmul.f32 1.0, %v810
    %v812 = vmul.f32 %v804, %v640
    %v813 = vmul.f32 %v798, %v805
    %v814 = vadd.f32 %v812, %v813
    %v815 = vtanh.pop %v814
    %v816 = vmul.f32 %v811, %v815
    %v817 = vld [vmem:[#allocation2 + $0x80] sm:$0xff]
    %v818 = vld [vmem:[#allocation2 + $0x88] sm:$0xff]
    %v819 = vld [vmem:[#allocation2 + $0x90] sm:$0xff]
    %v820 = vld [vmem:[#allocation2 + $0x98] sm:$0xff]
    %821 = vmatprep.subr.mxu0 %v58
    %822 = vmatpush1.msra.mxu0 %v57
    %823 = vmatprep.subr.mxu0 %v62
    %824 = vmatpush1.msra.mxu0 %v61
    %825 = vmatprep.subr.mxu0 %v66
    %826 = vmatpush1.msra.mxu0 %v65
    %827 = vmatprep.subr.mxu0 %v70
    %828 = vmatpush1.msra.mxu0 %v69
    %829 = vmatprep.subr.mxu0 %v74
    %830 = vmatpush1.msra.mxu0 %v73
    %831 = vmatprep.subr.mxu0 %v78
    %832 = vmatpush1.msra.mxu0 %v77
    %833 = vmatprep.subr.mxu0 %v82
    %834 = vmatpush1.msra.mxu0 %v81
    %835 = vmatprep.subr.mxu0 %v86
    %836 = vmatpush1.msra.mxu0 %v85
    %837 = vmatprep.subr.mxu0 %v90
    %838 = vmatpush1.msra.mxu0 %v89
    %839 = vmatprep.subr.mxu0 %v94
    %840 = vmatpush1.msra.mxu0 %v93
    %841 = vmatprep.subr.mxu0 %v98
    %842 = vmatpush1.msra.mxu0 %v97
    %843 = vmatprep.subr.mxu0 %v102
    %844 = vmatpush1.msra.mxu0 %v101
    %845 = vmatprep.subr.mxu0 %v106
    %846 = vmatpush1.msra.mxu0 %v105
    %847 = vmatprep.subr.mxu0 %v110
    %848 = vmatpush1.msra.mxu0 %v109
    %849 = vmatprep.subr.mxu0 %v114
    %850 = vmatpush1.msra.mxu0 %v113
    %851 = vmatprep.subr.mxu0 %v118
    %852 = vmatpush1.msra.mxu0 %v117
    %853 = vmatprep.subr.mxu0 0.0
    %854 = vmatpush1.msra.mxu0 0.0
    %855 = vmatprep.subr.mxu0 0.0
    %856 = vmatpush1.msra.mxu0 0.0
    %857 = vmatprep.subr.mxu0 0.0
    %858 = vmatpush1.msra.mxu0 0.0
    %859 = vmatprep.subr.mxu0 0.0
    %860 = vmatpush1.msra.mxu0 0.0
    %861 = vmatprep.subr.mxu0 0.0
    %862 = vmatpush1.msra.mxu0 0.0
    %863 = vmatprep.subr.mxu0 0.0
    %864 = vmatpush1.msra.mxu0 0.0
    %865 = vmatprep.subr.mxu0 0.0
    %866 = vmatpush1.msra.mxu0 0.0
    %867 = vmatprep.subr.mxu0 0.0
    %868 = vmatpush1.msra.mxu0 0.0
    %869 = vmatprep.subr.mxu0 0.0
    %870 = vmatpush1.msra.mxu0 0.0
    %871 = vmatprep.subr.mxu0 0.0
    %872 = vmatpush1.msra.mxu0 0.0
    %873 = vmatprep.subr.mxu0 0.0
    %874 = vmatpush1.msra.mxu0 0.0
    %875 = vmatprep.subr.mxu0 0.0
    %876 = vmatpush1.msra.mxu0 0.0
    %877 = vmatprep.subr.mxu0 0.0
    %878 = vmatpush1.msra.mxu0 0.0
    %879 = vmatprep.subr.mxu0 0.0
    %880 = vmatpush1.msra.mxu0 0.0
    %881 = vmatprep.subr.mxu0 0.0
    %882 = vmatpush1.msra.mxu0 0.0
    %883 = vmatprep.subr.mxu0 0.0
    %884 = vmatpush1.msra.mxu0 0.0
    %885 = vmatprep.mubr.f32.mxu0 0.0
    %886 = vmatmul.mubr.f32.gmra.mrb[0].mxu0 %v816
    %v887 = vpop.f32.mrb[0].mxu0
    %v888 = vadd.f32 0.0, %v887
    %v889 = vpop.f32.mrb[0].mxu0
    %v890 = vadd.f32 0.0, %v889
    %891 = vdwg.mxu0
    %892 = vmatprep.subr.mxu0 %v60
    %893 = vmatpush1.msra.mxu0 %v59
    %894 = vmatprep.subr.mxu0 %v64
    %895 = vmatpush1.msra.mxu0 %v63
    %896 = vmatprep.subr.mxu0 %v68
    %897 = vmatpush1.msra.mxu0 %v67
    %898 = vmatprep.subr.mxu0 %v72
    %899 = vmatpush1.msra.mxu0 %v71
    %900 = vmatprep.subr.mxu0 %v76
    %901 = vmatpush1.msra.mxu0 %v75
    %902 = vmatprep.subr.mxu0 %v80
    %903 = vmatpush1.msra.mxu0 %v79
    %904 = vmatprep.subr.mxu0 %v84
    %905 = vmatpush1.msra.mxu0 %v83
    %906 = vmatprep.subr.mxu0 %v88
    %907 = vmatpush1.msra.mxu0 %v87
    %908 = vmatprep.subr.mxu0 %v92
    %909 = vmatpush1.msra.mxu0 %v91
    %910 = vmatprep.subr.mxu0 %v96
    %911 = vmatpush1.msra.mxu0 %v95
    %912 = vmatprep.subr.mxu0 %v100
    %913 = vmatpush1.msra.mxu0 %v99
    %914 = vmatprep.subr.mxu0 %v104
    %915 = vmatpush1.msra.mxu0 %v103
    %916 = vmatprep.subr.mxu0 %v108
    %917 = vmatpush1.msra.mxu0 %v107
    %918 = vmatprep.subr.mxu0 %v112
    %919 = vmatpush1.msra.mxu0 %v111
    %920 = vmatprep.subr.mxu0 %v116
    %921 = vmatpush1.msra.mxu0 %v115
    %922 = vmatprep.subr.mxu0 %v120
    %923 = vmatpush1.msra.mxu0 %v119
    %924 = vmatprep.subr.mxu0 0.0
    %925 = vmatpush1.msra.mxu0 0.0
    %926 = vmatprep.subr.mxu0 0.0
    %927 = vmatpush1.msra.mxu0 0.0
    %928 = vmatprep.subr.mxu0 0.0
    %929 = vmatpush1.msra.mxu0 0.0
    %930 = vmatprep.subr.mxu0 0.0
    %931 = vmatpush1.msra.mxu0 0.0
    %932 = vmatprep.subr.mxu0 0.0
    %933 = vmatpush1.msra.mxu0 0.0
    %934 = vmatprep.subr.mxu0 0.0
    %935 = vmatpush1.msra.mxu0 0.0
    %936 = vmatprep.subr.mxu0 0.0
    %937 = vmatpush1.msra.mxu0 0.0
    %938 = vmatprep.subr.mxu0 0.0
    %939 = vmatpush1.msra.mxu0 0.0
    %940 = vmatprep.subr.mxu0 0.0
    %941 = vmatpush1.msra.mxu0 0.0
    %942 = vmatprep.subr.mxu0 0.0
    %943 = vmatpush1.msra.mxu0 0.0
    %944 = vmatprep.subr.mxu0 0.0
    %945 = vmatpush1.msra.mxu0 0.0
    %946 = vmatprep.subr.mxu0 0.0
    %947 = vmatpush1.msra.mxu0 0.0
    %948 = vmatprep.subr.mxu0 0.0
    %949 = vmatpush1.msra.mxu0 0.0
    %950 = vmatprep.subr.mxu0 0.0
    %951 = vmatpush1.msra.mxu0 0.0
    %952 = vmatprep.subr.mxu0 0.0
    %953 = vmatpush1.msra.mxu0 0.0
    %954 = vmatprep.subr.mxu0 0.0
    %955 = vmatpush1.msra.mxu0 0.0
    %956 = vmatprep.mubr.f32.mxu0 0.0
    %957 = vmatmul.mubr.f32.gmra.mrb[0].mxu0 %v816
    %v958 = vpop.f32.mrb[0].mxu0
    %v959 = vadd.f32 0.0, %v958
    %v960 = vpop.f32.mrb[0].mxu0
    %v961 = vadd.f32 0.0, %v960
    %962 = vdwg.mxu0
    %v963 = vadd.f32 %v817, %v888
    %v964 = vadd.f32 %v818, %v890
    %v965 = vadd.f32 %v819, %v959
    %v966 = vadd.f32 %v820, %v961
    %v967 = vxor.u32 %v963, 2147483648
    %v968 = vmul.f32 %v967, 1.442695
    %v969 = vpow.pop %v968
    %v970 = vadd.f32 %v969, 1.0
    %v971 = vrcp.pop %v970
    %v972 = vmul.f32 1.0, %v971
    %v973 = vxor.u32 %v964, 2147483648
    %v974 = vmul.f32 %v973, 1.442695
    %v975 = vpow.pop %v974
    %v976 = vadd.f32 %v975, 1.0
    %v977 = vrcp.pop %v976
    %v978 = vmul.f32 1.0, %v977
    %v979 = vtanh.pop %v965
    %v980 = vxor.u32 %v966, 2147483648
    %v981 = vmul.f32 %v980, 1.442695
    %v982 = vpow.pop %v981
    %v983 = vadd.f32 %v982, 1.0
    %v984 = vrcp.pop %v983
    %v985 = vmul.f32 1.0, %v984
    %v986 = vmul.f32 %v978, %v814
    %v987 = vmul.f32 %v972, %v979
    %v988 = vadd.f32 %v986, %v987
    %v989 = vtanh.pop %v988
    %v990 = vmul.f32 %v985, %v989
    %v991 = vld [vmem:[#allocation2 + $0xa0] sm:$0xff]
    %v992 = vld [vmem:[#allocation2 + $0xa8] sm:$0xff]
    %v993 = vld [vmem:[#allocation2 + $0xb0] sm:$0xff]
    %v994 = vld [vmem:[#allocation2 + $0xb8] sm:$0xff]
    %995 = vmatprep.subr.mxu0 %v58
    %996 = vmatpush1.msra.mxu0 %v57
    %997 = vmatprep.subr.mxu0 %v62
    %998 = vmatpush1.msra.mxu0 %v61
    %999 = vmatprep.subr.mxu0 %v66
    %1000 = vmatpush1.msra.mxu0 %v65
    %1001 = vmatprep.subr.mxu0 %v70
    %1002 = vmatpush1.msra.mxu0 %v69
    %1003 = vmatprep.subr.mxu0 %v74
    %1004 = vmatpush1.msra.mxu0 %v73
    %1005 = vmatprep.subr.mxu0 %v78
    %1006 = vmatpush1.msra.mxu0 %v77
    %1007 = vmatprep.subr.mxu0 %v82
    %1008 = vmatpush1.msra.mxu0 %v81
    %1009 = vmatprep.subr.mxu0 %v86
    %1010 = vmatpush1.msra.mxu0 %v85
    %1011 = vmatprep.subr.mxu0 %v90
    %1012 = vmatpush1.msra.mxu0 %v89
    %1013 = vmatprep.subr.mxu0 %v94
    %1014 = vmatpush1.msra.mxu0 %v93
    %1015 = vmatprep.subr.mxu0 %v98
    %1016 = vmatpush1.msra.mxu0 %v97
    %1017 = vmatprep.subr.mxu0 %v102
    %1018 = vmatpush1.msra.mxu0 %v101
    %1019 = vmatprep.subr.mxu0 %v106
    %1020 = vmatpush1.msra.mxu0 %v105
    %1021 = vmatprep.subr.mxu0 %v110
    %1022 = vmatpush1.msra.mxu0 %v109
    %1023 = vmatprep.subr.mxu0 %v114
    %1024 = vmatpush1.msra.mxu0 %v113
    %1025 = vmatprep.subr.mxu0 %v118
    %1026 = vmatpush1.msra.mxu0 %v117
    %1027 = vmatprep.subr.mxu0 0.0
    %1028 = vmatpush1.msra.mxu0 0.0
    %1029 = vmatprep.subr.mxu0 0.0
    %1030 = vmatpush1.msra.mxu0 0.0
    %1031 = vmatprep.subr.mxu0 0.0
    %1032 = vmatpush1.msra.mxu0 0.0
    %1033 = vmatprep.subr.mxu0 0.0
    %1034 = vmatpush1.msra.mxu0 0.0
    %1035 = vmatprep.subr.mxu0 0.0
    %1036 = vmatpush1.msra.mxu0 0.0
    %1037 = vmatprep.subr.mxu0 0.0
    %1038 = vmatpush1.msra.mxu0 0.0
    %1039 = vmatprep.subr.mxu0 0.0
    %1040 = vmatpush1.msra.mxu0 0.0
    %1041 = vmatprep.subr.mxu0 0.0
    %1042 = vmatpush1.msra.mxu0 0.0
    %1043 = vmatprep.subr.mxu0 0.0
    %1044 = vmatpush1.msra.mxu0 0.0
    %1045 = vmatprep.subr.mxu0 0.0
    %1046 = vmatpush1.msra.mxu0 0.0
    %1047 = vmatprep.subr.mxu0 0.0
    %1048 = vmatpush1.msra.mxu0 0.0
    %1049 = vmatprep.subr.mxu0 0.0
    %1050 = vmatpush1.msra.mxu0 0.0
    %1051 = vmatprep.subr.mxu0 0.0
    %1052 = vmatpush1.msra.mxu0 0.0
    %1053 = vmatprep.subr.mxu0 0.0
    %1054 = vmatpush1.msra.mxu0 0.0
    %1055 = vmatprep.subr.mxu0 0.0
    %1056 = vmatpush1.msra.mxu0 0.0
    %1057 = vmatprep.subr.mxu0 0.0
    %1058 = vmatpush1.msra.mxu0 0.0
    %1059 = vmatprep.mubr.f32.mxu0 0.0
    %1060 = vmatmul.mubr.f32.gmra.mrb[0].mxu0 %v990
    %v1061 = vpop.f32.mrb[0].mxu0
    %v1062 = vadd.f32 0.0, %v1061
    %v1063 = vpop.f32.mrb[0].mxu0
    %v1064 = vadd.f32 0.0, %v1063
    %1065 = vdwg.mxu0
    %1066 = vmatprep.subr.mxu0 %v60
    %1067 = vmatpush1.msra.mxu0 %v59
    %1068 = vmatprep.subr.mxu0 %v64
    %1069 = vmatpush1.msra.mxu0 %v63
    %1070 = vmatprep.subr.mxu0 %v68
    %1071 = vmatpush1.msra.mxu0 %v67
    %1072 = vmatprep.subr.mxu0 %v72
    %1073 = vmatpush1.msra.mxu0 %v71
    %1074 = vmatprep.subr.mxu0 %v76
    %1075 = vmatpush1.msra.mxu0 %v75
    %1076 = vmatprep.subr.mxu0 %v80
    %1077 = vmatpush1.msra.mxu0 %v79
    %1078 = vmatprep.subr.mxu0 %v84
    %1079 = vmatpush1.msra.mxu0 %v83
    %1080 = vmatprep.subr.mxu0 %v88
    %1081 = vmatpush1.msra.mxu0 %v87
    %1082 = vmatprep.subr.mxu0 %v92
    %1083 = vmatpush1.msra.mxu0 %v91
    %1084 = vmatprep.subr.mxu0 %v96
    %1085 = vmatpush1.msra.mxu0 %v95
    %1086 = vmatprep.subr.mxu0 %v100
    %1087 = vmatpush1.msra.mxu0 %v99
    %1088 = vmatprep.subr.mxu0 %v104
    %1089 = vmatpush1.msra.mxu0 %v103
    %1090 = vmatprep.subr.mxu0 %v108
    %1091 = vmatpush1.msra.mxu0 %v107
    %1092 = vmatprep.subr.mxu0 %v112
    %1093 = vmatpush1.msra.mxu0 %v111
    %1094 = vmatprep.subr.mxu0 %v116
    %1095 = vmatpush1.msra.mxu0 %v115
    %1096 = vmatprep.subr.mxu0 %v120
    %1097 = vmatpush1.msra.mxu0 %v119
    %1098 = vmatprep.subr.mxu0 0.0
    %1099 = vmatpush1.msra.mxu0 0.0
    %1100 = vmatprep.subr.mxu0 0.0
    %1101 = vmatpush1.msra.mxu0 0.0
    %1102 = vmatprep.subr.mxu0 0.0
    %1103 = vmatpush1.msra.mxu0 0.0
    %1104 = vmatprep.subr.mxu0 0.0
    %1105 = vmatpush1.msra.mxu0 0.0
    %1106 = vmatprep.subr.mxu0 0.0
    %1107 = vmatpush1.msra.mxu0 0.0
    %1108 = vmatprep.subr.mxu0 0.0
    %1109 = vmatpush1.msra.mxu0 0.0
    %1110 = vmatprep.subr.mxu0 0.0
    %1111 = vmatpush1.msra.mxu0 0.0
    %1112 = vmatprep.subr.mxu0 0.0
    %1113 = vmatpush1.msra.mxu0 0.0
    %1114 = vmatprep.subr.mxu0 0.0
    %1115 = vmatpush1.msra.mxu0 0.0
    %1116 = vmatprep.subr.mxu0 0.0
    %1117 = vmatpush1.msra.mxu0 0.0
    %1118 = vmatprep.subr.mxu0 0.0
    %1119 = vmatpush1.msra.mxu0 0.0
    %1120 = vmatprep.subr.mxu0 0.0
    %1121 = vmatpush1.msra.mxu0 0.0
    %1122 = vmatprep.subr.mxu0 0.0
    %1123 = vmatpush1.msra.mxu0 0.0
    %1124 = vmatprep.subr.mxu0 0.0
    %1125 = vmatpush1.msra.mxu0 0.0
    %1126 = vmatprep.subr.mxu0 0.0
    %1127 = vmatpush1.msra.mxu0 0.0
    %1128 = vmatprep.subr.mxu0 0.0
    %1129 = vmatpush1.msra.mxu0 0.0
    %1130 = vmatprep.mubr.f32.mxu0 0.0
    %1131 = vmatmul.mubr.f32.gmra.mrb[0].mxu0 %v990
    %v1132 = vpop.f32.mrb[0].mxu0
    %v1133 = vadd.f32 0.0, %v1132
    %v1134 = vpop.f32.mrb[0].mxu0
    %v1135 = vadd.f32 0.0, %v1134
    %1136 = vdwg.mxu0
    %v1137 = vadd.f32 %v991, %v1062
    %v1138 = vadd.f32 %v992, %v1064
    %v1139 = vadd.f32 %v993, %v1133
    %v1140 = vadd.f32 %v994, %v1135
    %v1141 = vxor.u32 %v1137, 2147483648
    %v1142 = vmul.f32 %v1141, 1.442695
    %v1143 = vpow.pop %v1142
    %v1144 = vadd.f32 %v1143, 1.0
    %v1145 = vrcp.pop %v1144
    %v1146 = vmul.f32 1.0, %v1145
    %v1147 = vxor.u32 %v1138, 2147483648
    %v1148 = vmul.f32 %v1147, 1.442695
    %v1149 = vpow.pop %v1148
    %v1150 = vadd.f32 %v1149, 1.0
    %v1151 = vrcp.pop %v1150
    %v1152 = vmul.f32 1.0, %v1151
    %v1153 = vtanh.pop %v1139
    %v1154 = vxor.u32 %v1140, 2147483648
    %v1155 = vmul.f32 %v1154, 1.442695
    %v1156 = vpow.pop %v1155
    %v1157 = vadd.f32 %v1156, 1.0
    %v1158 = vrcp.pop %v1157
    %v1159 = vmul.f32 1.0, %v1158
    %v1160 = vmul.f32 %v1152, %v988
    %v1161 = vmul.f32 %v1146, %v1153
    %v1162 = vadd.f32 %v1160, %v1161
    %v1163 = vtanh.pop %v1162
    %v1164 = vmul.f32 %v1159, %v1163
    %v1165 = vld [vmem:[#allocation2 + $0xc0] sm:$0xff]
    %v1166 = vld [vmem:[#allocation2 + $0xc8] sm:$0xff]
    %v1167 = vld [vmem:[#allocation2 + $0xd0] sm:$0xff]
    %v1168 = vld [vmem:[#allocation2 + $0xd8] sm:$0xff]
    %1169 = vmatprep.subr.mxu0 %v58
    %1170 = vmatpush1.msra.mxu0 %v57
    %1171 = vmatprep.subr.mxu0 %v62
    %1172 = vmatpush1.msra.mxu0 %v61
    %1173 = vmatprep.subr.mxu0 %v66
    %1174 = vmatpush1.msra.mxu0 %v65
    %1175 = vmatprep.subr.mxu0 %v70
    %1176 = vmatpush1.msra.mxu0 %v69
    %1177 = vmatprep.subr.mxu0 %v74
    %1178 = vmatpush1.msra.mxu0 %v73
    %1179 = vmatprep.subr.mxu0 %v78
    %1180 = vmatpush1.msra.mxu0 %v77
    %1181 = vmatprep.subr.mxu0 %v82
    %1182 = vmatpush1.msra.mxu0 %v81
    %1183 = vmatprep.subr.mxu0 %v86
    %1184 = vmatpush1.msra.mxu0 %v85
    %1185 = vmatprep.subr.mxu0 %v90
    %1186 = vmatpush1.msra.mxu0 %v89
    %1187 = vmatprep.subr.mxu0 %v94
    %1188 = vmatpush1.msra.mxu0 %v93
    %1189 = vmatprep.subr.mxu0 %v98
    %1190 = vmatpush1.msra.mxu0 %v97
    %1191 = vmatprep.subr.mxu0 %v102
    %1192 = vmatpush1.msra.mxu0 %v101
    %1193 = vmatprep.subr.mxu0 %v106
    %1194 = vmatpush1.msra.mxu0 %v105
    %1195 = vmatprep.subr.mxu0 %v110
    %1196 = vmatpush1.msra.mxu0 %v109
    %1197 = vmatprep.subr.mxu0 %v114
    %1198 = vmatpush1.msra.mxu0 %v113
    %1199 = vmatprep.subr.mxu0 %v118
    %1200 = vmatpush1.msra.mxu0 %v117
    %1201 = vmatprep.subr.mxu0 0.0
    %1202 = vmatpush1.msra.mxu0 0.0
    %1203 = vmatprep.subr.mxu0 0.0
    %1204 = vmatpush1.msra.mxu0 0.0
    %1205 = vmatprep.subr.mxu0 0.0
    %1206 = vmatpush1.msra.mxu0 0.0
    %1207 = vmatprep.subr.mxu0 0.0
    %1208 = vmatpush1.msra.mxu0 0.0
    %1209 = vmatprep.subr.mxu0 0.0
    %1210 = vmatpush1.msra.mxu0 0.0
    %1211 = vmatprep.subr.mxu0 0.0
    %1212 = vmatpush1.msra.mxu0 0.0
    %1213 = vmatprep.subr.mxu0 0.0
    %1214 = vmatpush1.msra.mxu0 0.0
    %1215 = vmatprep.subr.mxu0 0.0
    %1216 = vmatpush1.msra.mxu0 0.0
    %1217 = vmatprep.subr.mxu0 0.0
    %1218 = vmatpush1.msra.mxu0 0.0
    %1219 = vmatprep.subr.mxu0 0.0
    %1220 = vmatpush1.msra.mxu0 0.0
    %1221 = vmatprep.subr.mxu0 0.0
    %1222 = vmatpush1.msra.mxu0 0.0
    %1223 = vmatprep.subr.mxu0 0.0
    %1224 = vmatpush1.msra.mxu0 0.0
    %1225 = vmatprep.subr.mxu0 0.0
    %1226 = vmatpush1.msra.mxu0 0.0
    %1227 = vmatprep.subr.mxu0 0.0
    %1228 = vmatpush1.msra.mxu0 0.0
    %1229 = vmatprep.subr.mxu0 0.0
    %1230 = vmatpush1.msra.mxu0 0.0
    %1231 = vmatprep.subr.mxu0 0.0
    %1232 = vmatpush1.msra.mxu0 0.0
    %1233 = vmatprep.mubr.f32.mxu0 0.0
    %1234 = vmatmul.mubr.f32.gmra.mrb[0].mxu0 %v1164
    %v1235 = vpop.f32.mrb[0].mxu0
    %v1236 = vadd.f32 0.0, %v1235
    %v1237 = vpop.f32.mrb[0].mxu0
    %v1238 = vadd.f32 0.0, %v1237
    %1239 = vdwg.mxu0
    %1240 = vmatprep.subr.mxu0 %v60
    %1241 = vmatpush1.msra.mxu0 %v59
    %1242 = vmatprep.subr.mxu0 %v64
    %1243 = vmatpush1.msra.mxu0 %v63
    %1244 = vmatprep.subr.mxu0 %v68
    %1245 = vmatpush1.msra.mxu0 %v67
    %1246 = vmatprep.subr.mxu0 %v72
    %1247 = vmatpush1.msra.mxu0 %v71
    %1248 = vmatprep.subr.mxu0 %v76
    %1249 = vmatpush1.msra.mxu0 %v75
    %1250 = vmatprep.subr.mxu0 %v80
    %1251 = vmatpush1.msra.mxu0 %v79
    %1252 = vmatprep.subr.mxu0 %v84
    %1253 = vmatpush1.msra.mxu0 %v83
    %1254 = vmatprep.subr.mxu0 %v88
    %1255 = vmatpush1.msra.mxu0 %v87
    %1256 = vmatprep.subr.mxu0 %v92
    %1257 = vmatpush1.msra.mxu0 %v91
    %1258 = vmatprep.subr.mxu0 %v96
    %1259 = vmatpush1.msra.mxu0 %v95
    %1260 = vmatprep.subr.mxu0 %v100
    %1261 = vmatpush1.msra.mxu0 %v99
    %1262 = vmatprep.subr.mxu0 %v104
    %1263 = vmatpush1.msra.mxu0 %v103
    %1264 = vmatprep.subr.mxu0 %v108
    %1265 = vmatpush1.msra.mxu0 %v107
    %1266 = vmatprep.subr.mxu0 %v112
    %1267 = vmatpush1.msra.mxu0 %v111
    %1268 = vmatprep.subr.mxu0 %v116
    %1269 = vmatpush1.msra.mxu0 %v115
    %1270 = vmatprep.subr.mxu0 %v120
    %1271 = vmatpush1.msra.mxu0 %v119
    %1272 = vmatprep.subr.mxu0 0.0
    %1273 = vmatpush1.msra.mxu0 0.0
    %1274 = vmatprep.subr.mxu0 0.0
    %1275 = vmatpush1.msra.mxu0 0.0
    %1276 = vmatprep.subr.mxu0 0.0
    %1277 = vmatpush1.msra.mxu0 0.0
    %1278 = vmatprep.subr.mxu0 0.0
    %1279 = vmatpush1.msra.mxu0 0.0
    %1280 = vmatprep.subr.mxu0 0.0
    %1281 = vmatpush1.msra.mxu0 0.0
    %1282 = vmatprep.subr.mxu0 0.0
    %1283 = vmatpush1.msra.mxu0 0.0
    %1284 = vmatprep.subr.mxu0 0.0
    %1285 = vmatpush1.msra.mxu0 0.0
    %1286 = vmatprep.subr.mxu0 0.0
    %1287 = vmatpush1.msra.mxu0 0.0
    %1288 = vmatprep.subr.mxu0 0.0
    %1289 = vmatpush1.msra.mxu0 0.0
    %1290 = vmatprep.subr.mxu0 0.0
    %1291 = vmatpush1.msra.mxu0 0.0
    %1292 = vmatprep.subr.mxu0 0.0
    %1293 = vmatpush1.msra.mxu0 0.0
    %1294 = vmatprep.subr.mxu0 0.0
    %1295 = vmatpush1.msra.mxu0 0.0
    %1296 = vmatprep.subr.mxu0 0.0
    %1297 = vmatpush1.msra.mxu0 0.0
    %1298 = vmatprep.subr.mxu0 0.0
    %1299 = vmatpush1.msra.mxu0 0.0
    %1300 = vmatprep.subr.mxu0 0.0
    %1301 = vmatpush1.msra.mxu0 0.0
    %1302 = vmatprep.subr.mxu0 0.0
    %1303 = vmatpush1.msra.mxu0 0.0
    %1304 = vmatprep.mubr.f32.mxu0 0.0
    %1305 = vmatmul.mubr.f32.gmra.mrb[0].mxu0 %v1164
    %v1306 = vpop.f32.mrb[0].mxu0
    %v1307 = vadd.f32 0.0, %v1306
    %v1308 = vpop.f32.mrb[0].mxu0
    %v1309 = vadd.f32 0.0, %v1308
    %1310 = vdwg.mxu0
    %v1311 = vadd.f32 %v1165, %v1236
    %v1312 = vadd.f32 %v1166, %v1238
    %v1313 = vadd.f32 %v1167, %v1307
    %v1314 = vadd.f32 %v1168, %v1309
    %v1315 = vxor.u32 %v1311, 2147483648
    %v1316 = vmul.f32 %v1315, 1.442695
    %v1317 = vpow.pop %v1316
    %v1318 = vadd.f32 %v1317, 1.0
    %v1319 = vrcp.pop %v1318
    %v1320 = vmul.f32 1.0, %v1319
    %v1321 = vxor.u32 %v1312, 2147483648
    %v1322 = vmul.f32 %v1321, 1.442695
    %v1323 = vpow.pop %v1322
    %v1324 = vadd.f32 %v1323, 1.0
    %v1325 = vrcp.pop %v1324
    %v1326 = vmul.f32 1.0, %v1325
    %v1327 = vtanh.pop %v1313
    %v1328 = vxor.u32 %v1314, 2147483648
    %v1329 = vmul.f32 %v1328, 1.442695
    %v1330 = vpow.pop %v1329
    %v1331 = vadd.f32 %v1330, 1.0
    %v1332 = vrcp.pop %v1331
    %v1333 = vmul.f32 1.0, %v1332
    %v1334 = vmul.f32 %v1326, %v1162
    %v1335 = vmul.f32 %v1320, %v1327
    %v1336 = vadd.f32 %v1334, %v1335
    %v1337 = vtanh.pop %v1336
    %v1338 = vmul.f32 %v1333, %v1337
    %v1339 = vld [vmem:[#allocation2 + $0xe0] sm:$0xff]
    %v1340 = vld [vmem:[#allocation2 + $0xe8] sm:$0xff]
    %v1341 = vld [vmem:[#allocation2 + $0xf0] sm:$0xff]
    %v1342 = vld [vmem:[#allocation2 + $0xf8] sm:$0xff]
    %1343 = vmatprep.subr.mxu0 %v58
    %1344 = vmatpush1.msra.mxu0 %v57
    %1345 = vmatprep.subr.mxu0 %v62
    %1346 = vmatpush1.msra.mxu0 %v61
    %1347 = vmatprep.subr.mxu0 %v66
    %1348 = vmatpush1.msra.mxu0 %v65
    %1349 = vmatprep.subr.mxu0 %v70
    %1350 = vmatpush1.msra.mxu0 %v69
    %1351 = vmatprep.subr.mxu0 %v74
    %1352 = vmatpush1.msra.mxu0 %v73
    %1353 = vmatprep.subr.mxu0 %v78
    %1354 = vmatpush1.msra.mxu0 %v77
    %1355 = vmatprep.subr.mxu0 %v82
    %1356 = vmatpush1.msra.mxu0 %v81
    %1357 = vmatprep.subr.mxu0 %v86
    %1358 = vmatpush1.msra.mxu0 %v85
    %1359 = vmatprep.subr.mxu0 %v90
    %1360 = vmatpush1.msra.mxu0 %v89
    %1361 = vmatprep.subr.mxu0 %v94
    %1362 = vmatpush1.msra.mxu0 %v93
    %1363 = vmatprep.subr.mxu0 %v98
    %1364 = vmatpush1.msra.mxu0 %v97
    %1365 = vmatprep.subr.mxu0 %v102
    %1366 = vmatpush1.msra.mxu0 %v101
    %1367 = vmatprep.subr.mxu0 %v106
    %1368 = vmatpush1.msra.mxu0 %v105
    %1369 = vmatprep.subr.mxu0 %v110
    %1370 = vmatpush1.msra.mxu0 %v109
    %1371 = vmatprep.subr.mxu0 %v114
    %1372 = vmatpush1.msra.mxu0 %v113
    %1373 = vmatprep.subr.mxu0 %v118
    %1374 = vmatpush1.msra.mxu0 %v117
    %1375 = vmatprep.subr.mxu0 0.0
    %1376 = vmatpush1.msra.mxu0 0.0
    %1377 = vmatprep.subr.mxu0 0.0
    %1378 = vmatpush1.msra.mxu0 0.0
    %1379 = vmatprep.subr.mxu0 0.0
    %1380 = vmatpush1.msra.mxu0 0.0
    %1381 = vmatprep.subr.mxu0 0.0
    %1382 = vmatpush1.msra.mxu0 0.0
    %1383 = vmatprep.subr.mxu0 0.0
    %1384 = vmatpush1.msra.mxu0 0.0
    %1385 = vmatprep.subr.mxu0 0.0
    %1386 = vmatpush1.msra.mxu0 0.0
    %1387 = vmatprep.subr.mxu0 0.0
    %1388 = vmatpush1.msra.mxu0 0.0
    %1389 = vmatprep.subr.mxu0 0.0
    %1390 = vmatpush1.msra.mxu0 0.0
    %1391 = vmatprep.subr.mxu0 0.0
    %1392 = vmatpush1.msra.mxu0 0.0
    %1393 = vmatprep.subr.mxu0 0.0
    %1394 = vmatpush1.msra.mxu0 0.0
    %1395 = vmatprep.subr.mxu0 0.0
    %1396 = vmatpush1.msra.mxu0 0.0
    %1397 = vmatprep.subr.mxu0 0.0
    %1398 = vmatpush1.msra.mxu0 0.0
    %1399 = vmatprep.subr.mxu0 0.0
    %1400 = vmatpush1.msra.mxu0 0.0
    %1401 = vmatprep.subr.mxu0 0.0
    %1402 = vmatpush1.msra.mxu0 0.0
    %1403 = vmatprep.subr.mxu0 0.0
    %1404 = vmatpush1.msra.mxu0 0.0
    %1405 = vmatprep.subr.mxu0 0.0
    %1406 = vmatpush1.msra.mxu0 0.0
    %1407 = vmatprep.mubr.f32.mxu0 0.0
    %1408 = vmatmul.mubr.f32.gmra.mrb[0].mxu0 %v1338
    %v1409 = vpop.f32.mrb[0].mxu0
    %v1410 = vadd.f32 0.0, %v1409
    %v1411 = vpop.f32.mrb[0].mxu0
    %v1412 = vadd.f32 0.0, %v1411
    %1413 = vdwg.mxu0
    %1414 = vmatprep.subr.mxu0 %v60
    %1415 = vmatpush1.msra.mxu0 %v59
    %1416 = vmatprep.subr.mxu0 %v64
    %1417 = vmatpush1.msra.mxu0 %v63
    %1418 = vmatprep.subr.mxu0 %v68
    %1419 = vmatpush1.msra.mxu0 %v67
    %1420 = vmatprep.subr.mxu0 %v72
    %1421 = vmatpush1.msra.mxu0 %v71
    %1422 = vmatprep.subr.mxu0 %v76
    %1423 = vmatpush1.msra.mxu0 %v75
    %1424 = vmatprep.subr.mxu0 %v80
    %1425 = vmatpush1.msra.mxu0 %v79
    %1426 = vmatprep.subr.mxu0 %v84
    %1427 = vmatpush1.msra.mxu0 %v83
    %1428 = vmatprep.subr.mxu0 %v88
    %1429 = vmatpush1.msra.mxu0 %v87
    %1430 = vmatprep.subr.mxu0 %v92
    %1431 = vmatpush1.msra.mxu0 %v91
    %1432 = vmatprep.subr.mxu0 %v96
    %1433 = vmatpush1.msra.mxu0 %v95
    %1434 = vmatprep.subr.mxu0 %v100
    %1435 = vmatpush1.msra.mxu0 %v99
    %1436 = vmatprep.subr.mxu0 %v104
    %1437 = vmatpush1.msra.mxu0 %v103
    %1438 = vmatprep.subr.mxu0 %v108
    %1439 = vmatpush1.msra.mxu0 %v107
    %1440 = vmatprep.subr.mxu0 %v112
    %1441 = vmatpush1.msra.mxu0 %v111
    %1442 = vmatprep.subr.mxu0 %v116
    %1443 = vmatpush1.msra.mxu0 %v115
    %1444 = vmatprep.subr.mxu0 %v120
    %1445 = vmatpush1.msra.mxu0 %v119
    %1446 = vmatprep.subr.mxu0 0.0
    %1447 = vmatpush1.msra.mxu0 0.0
    %1448 = vmatprep.subr.mxu0 0.0
    %1449 = vmatpush1.msra.mxu0 0.0
    %1450 = vmatprep.subr.mxu0 0.0
    %1451 = vmatpush1.msra.mxu0 0.0
    %1452 = vmatprep.subr.mxu0 0.0
    %1453 = vmatpush1.msra.mxu0 0.0
    %1454 = vmatprep.subr.mxu0 0.0
    %1455 = vmatpush1.msra.mxu0 0.0
    %1456 = vmatprep.subr.mxu0 0.0
    %1457 = vmatpush1.msra.mxu0 0.0
    %1458 = vmatprep.subr.mxu0 0.0
    %1459 = vmatpush1.msra.mxu0 0.0
    %1460 = vmatprep.subr.mxu0 0.0
    %1461 = vmatpush1.msra.mxu0 0.0
    %1462 = vmatprep.subr.mxu0 0.0
    %1463 = vmatpush1.msra.mxu0 0.0
    %1464 = vmatprep.subr.mxu0 0.0
    %1465 = vmatpush1.msra.mxu0 0.0
    %1466 = vmatprep.subr.mxu0 0.0
    %1467 = vmatpush1.msra.mxu0 0.0
    %1468 = vmatprep.subr.mxu0 0.0
    %1469 = vmatpush1.msra.mxu0 0.0
    %1470 = vmatprep.subr.mxu0 0.0
    %1471 = vmatpush1.msra.mxu0 0.0
    %1472 = vmatprep.subr.mxu0 0.0
    %1473 = vmatpush1.msra.mxu0 0.0
    %1474 = vmatprep.subr.mxu0 0.0
    %1475 = vmatpush1.msra.mxu0 0.0
    %1476 = vmatprep.subr.mxu0 0.0
    %1477 = vmatpush1.msra.mxu0 0.0
    %1478 = vmatprep.mubr.f32.mxu0 0.0
    %1479 = vmatmul.mubr.f32.gmra.mrb[0].mxu0 %v1338
    %v1480 = vpop.f32.mrb[0].mxu0
    %v1481 = vadd.f32 0.0, %v1480
    %v1482 = vpop.f32.mrb[0].mxu0
    %v1483 = vadd.f32 0.0, %v1482
    %1484 = vdwg.mxu0
    %v1485 = vadd.f32 %v1339, %v1410
    %v1486 = vadd.f32 %v1340, %v1412
    %v1487 = vadd.f32 %v1341, %v1481
    %v1488 = vadd.f32 %v1342, %v1483
    %v1489 = vxor.u32 %v1485, 2147483648
    %v1490 = vmul.f32 %v1489, 1.442695
    %v1491 = vpow.pop %v1490
    %v1492 = vadd.f32 %v1491, 1.0
    %v1493 = vrcp.pop %v1492
    %v1494 = vmul.f32 1.0, %v1493
    %v1495 = vxor.u32 %v1486, 2147483648
    %v1496 = vmul.f32 %v1495, 1.442695
    %v1497 = vpow.pop %v1496
    %v1498 = vadd.f32 %v1497, 1.0
    %v1499 = vrcp.pop %v1498
    %v1500 = vmul.f32 1.0, %v1499
    %v1501 = vtanh.pop %v1487
    %v1502 = vxor.u32 %v1488, 2147483648
    %v1503 = vmul.f32 %v1502, 1.442695
    %v1504 = vpow.pop %v1503
    %v1505 = vadd.f32 %v1504, 1.0
    %v1506 = vrcp.pop %v1505
    %v1507 = vmul.f32 1.0, %v1506
    %v1508 = vmul.f32 %v1500, %v1336
    %v1509 = vmul.f32 %v1494, %v1501
    %v1510 = vadd.f32 %v1508, %v1509
    %v1511 = vtanh.pop %v1510
    %v1512 = vmul.f32 %v1507, %v1511
    %v1513 = vld [vmem:[#allocation7] sm:$0xff]
    %v1514 = vld [vmem:[#allocation7 + $0x8] sm:$0xff]
    %v1515 = vld [vmem:[#allocation7 + $0x10] sm:$0xff]
    %v1516 = vld [vmem:[#allocation7 + $0x18] sm:$0xff]
    %v1517 = vld [vmem:[#allocation7 + $0x20] sm:$0xff]
    %v1518 = vld [vmem:[#allocation7 + $0x28] sm:$0xff]
    %v1519 = vld [vmem:[#allocation7 + $0x30] sm:$0xff]
    %v1520 = vld [vmem:[#allocation7 + $0x38] sm:$0xff]
    %v1521 = vld [vmem:[#allocation7 + $0x40] sm:$0xff]
    %v1522 = vld [vmem:[#allocation7 + $0x48] sm:$0xff]
    %v1523 = vld [vmem:[#allocation7 + $0x50] sm:$0xff]
    %v1524 = vld [vmem:[#allocation7 + $0x58] sm:$0xff]
    %v1525 = vld [vmem:[#allocation7 + $0x60] sm:$0xff]
    %v1526 = vld [vmem:[#allocation7 + $0x68] sm:$0xff]
    %v1527 = vld [vmem:[#allocation7 + $0x70] sm:$0xff]
    %v1528 = vld [vmem:[#allocation7 + $0x78] sm:$0xff]
    %v1529 = vld [vmem:[%s3] sm:$0x1]
    %v1531 = vlaneseq
    %v1532 = vshrl.u32 %v1531, 7
    %v1533 = vsub.s32 0, %v1532
    %v1534 = vrot.slane %v1529, %v1533
    %1536 = vmatprep.subr.mxu0 0.0
    %1537 = vmatpush1.msra.mxu0 %v1513
    %1538 = vmatprep.subr.mxu0 0.0
    %1539 = vmatpush1.msra.mxu0 %v1514
    %1540 = vmatprep.subr.mxu0 0.0
    %1541 = vmatpush1.msra.mxu0 %v1515
    %1542 = vmatprep.subr.mxu0 0.0
    %1543 = vmatpush1.msra.mxu0 %v1516
    %1544 = vmatprep.subr.mxu0 0.0
    %1545 = vmatpush1.msra.mxu0 %v1517
    %1546 = vmatprep.subr.mxu0 0.0
    %1547 = vmatpush1.msra.mxu0 %v1518
    %1548 = vmatprep.subr.mxu0 0.0
    %1549 = vmatpush1.msra.mxu0 %v1519
    %1550 = vmatprep.subr.mxu0 0.0
    %1551 = vmatpush1.msra.mxu0 %v1520
    %1552 = vmatprep.subr.mxu0 0.0
    %1553 = vmatpush1.msra.mxu0 %v1521
    %1554 = vmatprep.subr.mxu0 0.0
    %1555 = vmatpush1.msra.mxu0 %v1522
    %1556 = vmatprep.subr.mxu0 0.0
    %1557 = vmatpush1.msra.mxu0 %v1523
    %1558 = vmatprep.subr.mxu0 0.0
    %1559 = vmatpush1.msra.mxu0 %v1524
    %1560 = vmatprep.subr.mxu0 0.0
    %1561 = vmatpush1.msra.mxu0 %v1525
    %1562 = vmatprep.subr.mxu0 0.0
    %1563 = vmatpush1.msra.mxu0 %v1526
    %1564 = vmatprep.subr.mxu0 0.0
    %1565 = vmatpush1.msra.mxu0 %v1527
    %1566 = vmatprep.subr.mxu0 0.0
    %1567 = vmatpush1.msra.mxu0 %v1528
    %1568 = vmatprep.subr.mxu0 0.0
    %1569 = vmatpush1.msra.mxu0 0.0
    %1570 = vmatprep.subr.mxu0 0.0
    %1571 = vmatpush1.msra.mxu0 0.0
    %1572 = vmatprep.subr.mxu0 0.0
    %1573 = vmatpush1.msra.mxu0 0.0
    %1574 = vmatprep.subr.mxu0 0.0
    %1575 = vmatpush1.msra.mxu0 0.0
    %1576 = vmatprep.subr.mxu0 0.0
    %1577 = vmatpush1.msra.mxu0 0.0
    %1578 = vmatprep.subr.mxu0 0.0
    %1579 = vmatpush1.msra.mxu0 0.0
    %1580 = vmatprep.subr.mxu0 0.0
    %1581 = vmatpush1.msra.mxu0 0.0
    %1582 = vmatprep.subr.mxu0 0.0
    %1583 = vmatpush1.msra.mxu0 0.0
    %1584 = vmatprep.subr.mxu0 0.0
    %1585 = vmatpush1.msra.mxu0 0.0
    %1586 = vmatprep.subr.mxu0 0.0
    %1587 = vmatpush1.msra.mxu0 0.0
    %1588 = vmatprep.subr.mxu0 0.0
    %1589 = vmatpush1.msra.mxu0 0.0
    %1590 = vmatprep.subr.mxu0 0.0
    %1591 = vmatpush1.msra.mxu0 0.0
    %1592 = vmatprep.subr.mxu0 0.0
    %1593 = vmatpush1.msra.mxu0 0.0
    %1594 = vmatprep.subr.mxu0 0.0
    %1595 = vmatpush1.msra.mxu0 0.0
    %1596 = vmatprep.subr.mxu0 0.0
    %1597 = vmatpush1.msra.mxu0 0.0
    %1598 = vmatprep.subr.mxu0 0.0
    %1599 = vmatpush1.msra.mxu0 0.0
    %1600 = vmatprep.mubr.f32.mxu0 0.0
    %1601 = vmatmul.mubr.f32.gmra.mrb[0].mxu0 %v1512
    %v1602 = vpop.f32.mrb[0].mxu0
    %v1603 = vadd.f32 %v1534, %v1602
    %v1604 = vpop.f32.mrb[0].mxu0
    %1605 = vdwg.mxu0
    %1606 = vst [vmem:[#allocation8] sm:$0xff] %v1603
    // Predicated region
    $region30: #{tpu_custom_call.1} parent=1 // pred_check
      _
    $region31: #{tpu_custom_call.1} parent=1 // pred_check_branch
      %1608 = sbr.rel (0) target = $region33
    $region32: #{tpu_custom_call.1} parent=1 // pred_region
      %s1610 = ssub.s32 128, 128
      %1611 = vsyncadd [#allocation4], %s1610
      %s1613 = sshll.u32 [#allocation8], 4
      %s1614 = int_to_ptr.vmem [resolvable:$true] %s1613
      %1616 = dma.vmem_to_hbm [thread:$0]  %s1614, 128, %s4, [#allocation4]
    $region33: #{tpu_custom_call.1} parent=1 // pred_fallthru
      _
    // Predicated region
    $region34: #{tpu_custom_call.1} parent=1 // pred_check
      _
    $region35: #{tpu_custom_call.1} parent=1 // pred_check_branch
      %1618 = sbr.rel (0) target = $region37
    $region36: #{tpu_custom_call.1} parent=1 // pred_region
      %1619 = dma.done [#allocation4], 128
    $region37: #{tpu_custom_call.1} parent=1 // pred_fallthru
      _
    %1620 = vsyncpa [#allocation3], 1
    %1621 = vsyncpa [#allocation6], 1
    %1622 = vsyncpa [#allocation4], 1

</llo_original>
